<compile_context>
chip_gen: v7x
topology: tpu7x:2x2x1
jax: 0.10.0
libtpu: 0.0.40
codegen_flags: <defaults>
</compile_context>

<pallas_src>
import jax
import jax.numpy as jnp
from jax import lax
from jax.experimental import pallas as pl
from jax.experimental.pallas import tpu as pltpu

# ----- hyperparameters (hp.*) -----------------------------------------------
V_SIZE = 16          # vocabulary size
EMBEDDING_DIM = 32   # hp.embedding_dim == hp.input_size (required for the LSTM)
INPUT_SIZE = 32
HIDDEN_SIZE = 32     # hp.hidden_size
SEQUENCE_LEN = 8     # hp.sequence_len
BATCH = 2


# ----- Pallas kernel: fused embedding-lookup + LSTM recurrence + FC ----------
def rnn_m2m_fused_kernel(ids_ref, embp_ref, w_hh_ref, b_ref,
                         w_fc_ref, b_fc_ref, out_ref):
    """ids_ref:  (T*B, 1) int32  time-major flattened token ids
       embp_ref: (V, 4H)         embedding @ (gate-scaled W_ih^T)   (=16x128)
       w_hh_ref: (H, 4H)         gate-scaled W_hh^T                 (=32x128)
       b_ref:    (1, 4H)         gate-scaled (b_ih + b_hh)
       w_fc_ref: (H, V)          W_fc^T                             (=32x16)
       b_fc_ref: (1, T*V)        b_fc tiled T times                 (=1x128)
       out_ref:  (B, T*V)        lane-dense packed logits (single store)."""
    TB = ids_ref.shape[0]
    VOC = embp_ref.shape[0]
    H = w_hh_ref.shape[0]
    B = out_ref.shape[0]
    T = TB // B

    # Embedding lookup as a one-hot matmul on the MXU; since emb_proj already
    # contains embedding @ W_ih^T, this is simultaneously the hoisted input
    # projection for ALL timesteps.  Bias folded once.
    ids = ids_ref[...]                                              # (TB, 1)
    voc_iota = lax.broadcasted_iota(jnp.int32, (TB, VOC), 1)        # (TB, V)
    onehot = (ids == voc_iota).astype(jnp.float32)                  # (16, 16)
    pre = (jnp.dot(onehot, embp_ref[...],
                   preferred_element_type=jnp.float32)
           + b_ref[...])                                            # (TB, 4H) = (16,128)

    w_hh = w_hh_ref[...]                                            # read once
    w_fc = w_fc_ref[...]
    h = jnp.zeros((B, H), jnp.float32)
    c = jnp.zeros((B, H), jnp.float32)

    logit_chunks = []
    # Fully unrolled recurrence (T static & tiny): only h @ W_hh and a single
    # tanh over the full (B,4H) gates vreg sit on the serial critical path.
    for t in range(T):
        gates = pre[t * B:(t + 1) * B, :] + jnp.dot(
            h, w_hh, preferred_element_type=jnp.float32)            # (B, 4H)
        tg = jnp.tanh(gates)        # one EUP pass; i/f/o cols were pre-scaled
        i_g = 0.5 * (tg[:, 0:H] + 1.0)          # sigmoid via tanh identity
        f_g = 0.5 * (tg[:, H:2 * H] + 1.0)
        g_g = tg[:, 2 * H:3 * H]
        o_g = 0.5 * (tg[:, 3 * H:4 * H] + 1.0)
        c = f_g * c + i_g * g_g
        h = o_g * jnp.tanh(c)
        # Output FC for this step (off the serial chain; PyTorch: fc(out_t)).
        logit_chunks.append(jnp.dot(h, w_fc,
                                    preferred_element_type=jnp.float32))

    # Pack (B, T*V) = (2, 128): lane dim multiple of 128 -> one unmasked store.
    out_ref[...] = jnp.concatenate(logit_chunks, axis=-1) + b_fc_ref[...]


@jax.jit
def rnn_m2m_forward(inputs, params):
    """inputs: (B, T) int32 token ids. Returns (B, T, V) float32 logits."""
    B, T = inputs.shape
    H, V = HIDDEN_SIZE, V_SIZE

    # --- weight prep (parameter-only; fused by XLA, no per-token work) ------
    # Scale i, f, o gate columns by 0.5 so sigmoid(x) == 0.5*(1+tanh(x_scaled)).
    gate_scale = jnp.concatenate([
        jnp.full((2 * H,), 0.5, jnp.float32),   # i, f
        jnp.ones((H,), jnp.float32),            # g (tanh, unscaled)
        jnp.full((H,), 0.5, jnp.float32),       # o
    ])
    w_ih_s = params["w_ih"].T * gate_scale                       # (E, 4H)
    emb_proj = jnp.dot(params["embedding"], w_ih_s)              # (V, 4H)
    w_hh_s = params["w_hh"].T * gate_scale                       # (H, 4H)
    b = ((params["b_ih"] + params["b_hh"]) * gate_scale).reshape(1, 4 * H)
    w_fc_t = params["w_fc"].T                                    # (H, V)
    b_fc_tiled = jnp.tile(params["b_fc"], T).reshape(1, T * V)   # (1, T*V)

    # Time-major flattened token ids (tiny int op; everything else is fused).
    ids_tm = inputs.T.reshape(T * B, 1).astype(jnp.int32)        # (T*B, 1)

    out_packed = pl.pallas_call(
        rnn_m2m_fused_kernel,
        out_shape=jax.ShapeDtypeStruct((B, T * V), jnp.float32),
        in_specs=[
            pl.BlockSpec(memory_space=pltpu.MemorySpace.VMEM),   # ids (T*B,1)
            pl.BlockSpec(memory_space=pltpu.MemorySpace.VMEM),   # emb_proj (V,4H)
            pl.BlockSpec(memory_space=pltpu.MemorySpace.VMEM),   # w_hh (H,4H)
            pl.BlockSpec(memory_space=pltpu.MemorySpace.VMEM),   # b    (1,4H)
            pl.BlockSpec(memory_space=pltpu.MemorySpace.VMEM),   # w_fc (H,V)
            pl.BlockSpec(memory_space=pltpu.MemorySpace.VMEM),   # b_fc (1,T*V)
        ],
        out_specs=pl.BlockSpec(memory_space=pltpu.MemorySpace.VMEM),
    )(ids_tm, emb_proj, w_hh_s, b, w_fc_t, b_fc_tiled)

    # Free reshape (contiguous), no transpose: (B, T*V) -> (B, T, V).
    return out_packed.reshape(B, T, V)


# ----- Pure-JAX reference (for correctness check) ----------------------------
def rnn_m2m_reference(inputs, params):
    H = HIDDEN_SIZE
    emb = jnp.take(params["embedding"], inputs, axis=0)      # (B, T, E)
    B, T, _ = emb.shape
    w_ih_t = params["w_ih"].T
    w_hh_t = params["w_hh"].T
    b = params["b_ih"] + params["b_hh"]

    def step(carry, x_t):
        h, c = carry
        gates = x_t @ w_ih_t + h @ w_hh_t + b
        i_g = jax.nn.sigmoid(gates[:, 0:H])
        f_g = jax.nn.sigmoid(gates[:, H:2 * H])
        g_g = jnp.tanh(gates[:, 2 * H:3 * H])
        o_g = jax.nn.sigmoid(gates[:, 3 * H:4 * H])
        c_new = f_g * c + i_g * g_g
        h_new = o_g * jnp.tanh(c_new)
        return (h_new, c_new), h_new

    h0 = jnp.zeros((B, H), jnp.float32)
    c0 = jnp.zeros((B, H), jnp.float32)
    _, hs = lax.scan(step, (h0, c0), jnp.transpose(emb, (1, 0, 2)))  # (T, B, H)
    logits = hs @ params["w_fc"].T + params["b_fc"]                   # (T, B, V)
    return jnp.transpose(logits, (1, 0, 2))


# ----- Deterministic parameter init (matches nn.Module shapes) ----------------
def init_params(key):
    H, E, V = HIDDEN_SIZE, EMBEDDING_DIM, V_SIZE
    ks = jax.random.split(key, 7)
    s = 1.0 / jnp.sqrt(jnp.float32(H))
    return {
        "embedding": jax.random.normal(ks[0], (V, E), jnp.float32),           # nn.Embedding(V, E)
        "w_ih": jax.random.uniform(ks[1], (4 * H, E), jnp.float32, -s, s),     # LSTM weight_ih_l0
        "w_hh": jax.random.uniform(ks[2], (4 * H, H), jnp.float32, -s, s),     # LSTM weight_hh_l0
        "b_ih": jax.random.uniform(ks[3], (4 * H,), jnp.float32, -s, s),       # LSTM bias_ih_l0
        "b_hh": jax.random.uniform(ks[4], (4 * H,), jnp.float32, -s, s),       # LSTM bias_hh_l0
        "w_fc": jax.random.uniform(ks[5], (V, H), jnp.float32, -s, s),         # nn.Linear(H, V).weight
        "b_fc": jax.random.uniform(ks[6], (V,), jnp.float32, -s, s),           # nn.Linear(H, V).bias
    }


if __name__ == "__main__":
    key = jax.random.PRNGKey(0)
    k_param, k_inp = jax.random.split(key)
    params = init_params(k_param)
    inputs = jax.random.randint(k_inp, (BATCH, SEQUENCE_LEN), 0, V_SIZE, jnp.int32)

    out = jax.block_until_ready(rnn_m2m_forward(inputs, params))
    assert out.shape == (BATCH, SEQUENCE_LEN, V_SIZE), out.shape

    ref = jax.block_until_ready(rnn_m2m_reference(inputs, params))
    assert jnp.allclose(out, ref, atol=1e-4, rtol=1e-4), "Pallas kernel mismatch vs reference"

    print("KERNEL_OK")
</pallas_src>

<mosaic_0001>
module attributes {stable_mosaic.version = 11 : i64} {
  func.func @rnn_m2m_fused_kernel(%arg0: memref<16x1xi32, #tpu.memory_space<vmem>>, %arg1: memref<16x128xf32, #tpu.memory_space<vmem>>, %arg2: memref<32x128xf32, #tpu.memory_space<vmem>>, %arg3: memref<1x128xf32, #tpu.memory_space<vmem>>, %arg4: memref<32x16xf32, #tpu.memory_space<vmem>>, %arg5: memref<1x128xf32, #tpu.memory_space<vmem>>, %arg6: memref<2x128xf32, #tpu.memory_space<vmem>>) attributes {dimension_semantics = [], scalar_prefetch = 0 : i64, scratch_operands = 0 : i64, tpu.core_type = #tpu.core_type<tc>} {
    %c0 = arith.constant 0 : index
    %c0_0 = arith.constant 0 : index
    %0 = vector.load %arg0[%c0, %c0_0] : memref<16x1xi32, #tpu.memory_space<vmem>>, vector<16x1xi32>
    %1 = tpu.iota {dimensions = array<i32: 1>} : vector<16x16xi32>
    %2 = vector.broadcast %0 : vector<16x1xi32> to vector<16x16xi32>
    %3 = arith.cmpi eq, %2, %1 : vector<16x16xi32>
    %4 = arith.extui %3 : vector<16x16xi1> to vector<16x16xi32>
    %5 = arith.sitofp %4 : vector<16x16xi32> to vector<16x16xf32>
    %c0_1 = arith.constant 0 : index
    %c0_2 = arith.constant 0 : index
    %6 = vector.load %arg1[%c0_1, %c0_2] : memref<16x128xf32, #tpu.memory_space<vmem>>, vector<16x128xf32>
    %cst = arith.constant dense<0.000000e+00> : vector<16x128xf32>
    %7 = tpu.matmul %5, %6, %cst {dimension_numbers = #tpu.dot_dimension_numbers<[1], [0], [0], [1], [0, 0, 1, 1], [], []>} : vector<16x16xf32>, vector<16x128xf32>, vector<16x128xf32> -> vector<16x128xf32>
    %c0_3 = arith.constant 0 : index
    %c0_4 = arith.constant 0 : index
    %8 = vector.load %arg3[%c0_3, %c0_4] : memref<1x128xf32, #tpu.memory_space<vmem>>, vector<1x128xf32>
    %9 = vector.broadcast %8 : vector<1x128xf32> to vector<16x128xf32>
    %10 = arith.addf %7, %9 : vector<16x128xf32>
    %c0_5 = arith.constant 0 : index
    %c0_6 = arith.constant 0 : index
    %11 = vector.load %arg2[%c0_5, %c0_6] : memref<32x128xf32, #tpu.memory_space<vmem>>, vector<32x128xf32>
    %c0_7 = arith.constant 0 : index
    %c0_8 = arith.constant 0 : index
    %12 = vector.load %arg4[%c0_7, %c0_8] : memref<32x16xf32, #tpu.memory_space<vmem>>, vector<32x16xf32>
    %cst_9 = arith.constant 0.000000e+00 : f32
    %13 = vector.broadcast %cst_9 : f32 to vector<2x32xf32>
    %cst_10 = arith.constant 0.000000e+00 : f32
    %14 = vector.broadcast %cst_10 : f32 to vector<2x32xf32>
    %15 = vector.extract_strided_slice %10 {offsets = [0, 0], sizes = [2, 128], strides = [1, 1]} : vector<16x128xf32> to vector<2x128xf32>
    %cst_11 = arith.constant dense<0.000000e+00> : vector<2x128xf32>
    %16 = tpu.matmul %13, %11, %cst_11 {dimension_numbers = #tpu.dot_dimension_numbers<[1], [0], [0], [1], [0, 0, 1, 1], [], []>} : vector<2x32xf32>, vector<32x128xf32>, vector<2x128xf32> -> vector<2x128xf32>
    %17 = arith.addf %15, %16 : vector<2x128xf32>
    %18 = math.tanh %17 : vector<2x128xf32>
    %19 = vector.extract_strided_slice %18 {offsets = [0, 0], sizes = [2, 32], strides = [1, 1]} : vector<2x128xf32> to vector<2x32xf32>
    %cst_12 = arith.constant 1.000000e+00 : f32
    %20 = vector.broadcast %cst_12 : f32 to vector<2x32xf32>
    %21 = arith.addf %19, %20 : vector<2x32xf32>
    %cst_13 = arith.constant 5.000000e-01 : f32
    %22 = vector.broadcast %cst_13 : f32 to vector<2x32xf32>
    %23 = arith.mulf %22, %21 : vector<2x32xf32>
    %24 = vector.extract_strided_slice %18 {offsets = [0, 32], sizes = [2, 32], strides = [1, 1]} : vector<2x128xf32> to vector<2x32xf32>
    %cst_14 = arith.constant 1.000000e+00 : f32
    %25 = vector.broadcast %cst_14 : f32 to vector<2x32xf32>
    %26 = arith.addf %24, %25 : vector<2x32xf32>
    %cst_15 = arith.constant 5.000000e-01 : f32
    %27 = vector.broadcast %cst_15 : f32 to vector<2x32xf32>
    %28 = arith.mulf %27, %26 : vector<2x32xf32>
    %29 = vector.extract_strided_slice %18 {offsets = [0, 64], sizes = [2, 32], strides = [1, 1]} : vector<2x128xf32> to vector<2x32xf32>
    %30 = vector.extract_strided_slice %18 {offsets = [0, 96], sizes = [2, 32], strides = [1, 1]} : vector<2x128xf32> to vector<2x32xf32>
    %cst_16 = arith.constant 1.000000e+00 : f32
    %31 = vector.broadcast %cst_16 : f32 to vector<2x32xf32>
    %32 = arith.addf %30, %31 : vector<2x32xf32>
    %cst_17 = arith.constant 5.000000e-01 : f32
    %33 = vector.broadcast %cst_17 : f32 to vector<2x32xf32>
    %34 = arith.mulf %33, %32 : vector<2x32xf32>
    %35 = arith.mulf %28, %14 : vector<2x32xf32>
    %36 = arith.mulf %23, %29 : vector<2x32xf32>
    %37 = arith.addf %35, %36 : vector<2x32xf32>
    %38 = math.tanh %37 : vector<2x32xf32>
    %39 = arith.mulf %34, %38 : vector<2x32xf32>
    %cst_18 = arith.constant dense<0.000000e+00> : vector<2x16xf32>
    %40 = tpu.matmul %39, %12, %cst_18 {dimension_numbers = #tpu.dot_dimension_numbers<[1], [0], [0], [1], [0, 0, 1, 1], [], []>} : vector<2x32xf32>, vector<32x16xf32>, vector<2x16xf32> -> vector<2x16xf32>
    %41 = vector.extract_strided_slice %10 {offsets = [2, 0], sizes = [2, 128], strides = [1, 1]} : vector<16x128xf32> to vector<2x128xf32>
    %cst_19 = arith.constant dense<0.000000e+00> : vector<2x128xf32>
    %42 = tpu.matmul %39, %11, %cst_19 {dimension_numbers = #tpu.dot_dimension_numbers<[1], [0], [0], [1], [0, 0, 1, 1], [], []>} : vector<2x32xf32>, vector<32x128xf32>, vector<2x128xf32> -> vector<2x128xf32>
    %43 = arith.addf %41, %42 : vector<2x128xf32>
    %44 = math.tanh %43 : vector<2x128xf32>
    %45 = vector.extract_strided_slice %44 {offsets = [0, 0], sizes = [2, 32], strides = [1, 1]} : vector<2x128xf32> to vector<2x32xf32>
    %cst_20 = arith.constant 1.000000e+00 : f32
    %46 = vector.broadcast %cst_20 : f32 to vector<2x32xf32>
    %47 = arith.addf %45, %46 : vector<2x32xf32>
    %cst_21 = arith.constant 5.000000e-01 : f32
    %48 = vector.broadcast %cst_21 : f32 to vector<2x32xf32>
    %49 = arith.mulf %48, %47 : vector<2x32xf32>
    %50 = vector.extract_strided_slice %44 {offsets = [0, 32], sizes = [2, 32], strides = [1, 1]} : vector<2x128xf32> to vector<2x32xf32>
    %cst_22 = arith.constant 1.000000e+00 : f32
    %51 = vector.broadcast %cst_22 : f32 to vector<2x32xf32>
    %52 = arith.addf %50, %51 : vector<2x32xf32>
    %cst_23 = arith.constant 5.000000e-01 : f32
    %53 = vector.broadcast %cst_23 : f32 to vector<2x32xf32>
    %54 = arith.mulf %53, %52 : vector<2x32xf32>
    %55 = vector.extract_strided_slice %44 {offsets = [0, 64], sizes = [2, 32], strides = [1, 1]} : vector<2x128xf32> to vector<2x32xf32>
    %56 = vector.extract_strided_slice %44 {offsets = [0, 96], sizes = [2, 32], strides = [1, 1]} : vector<2x128xf32> to vector<2x32xf32>
    %cst_24 = arith.constant 1.000000e+00 : f32
    %57 = vector.broadcast %cst_24 : f32 to vector<2x32xf32>
    %58 = arith.addf %56, %57 : vector<2x32xf32>
    %cst_25 = arith.constant 5.000000e-01 : f32
    %59 = vector.broadcast %cst_25 : f32 to vector<2x32xf32>
    %60 = arith.mulf %59, %58 : vector<2x32xf32>
    %61 = arith.mulf %54, %37 : vector<2x32xf32>
    %62 = arith.mulf %49, %55 : vector<2x32xf32>
    %63 = arith.addf %61, %62 : vector<2x32xf32>
    %64 = math.tanh %63 : vector<2x32xf32>
    %65 = arith.mulf %60, %64 : vector<2x32xf32>
    %cst_26 = arith.constant dense<0.000000e+00> : vector<2x16xf32>
    %66 = tpu.matmul %65, %12, %cst_26 {dimension_numbers = #tpu.dot_dimension_numbers<[1], [0], [0], [1], [0, 0, 1, 1], [], []>} : vector<2x32xf32>, vector<32x16xf32>, vector<2x16xf32> -> vector<2x16xf32>
    %67 = vector.extract_strided_slice %10 {offsets = [4, 0], sizes = [2, 128], strides = [1, 1]} : vector<16x128xf32> to vector<2x128xf32>
    %cst_27 = arith.constant dense<0.000000e+00> : vector<2x128xf32>
    %68 = tpu.matmul %65, %11, %cst_27 {dimension_numbers = #tpu.dot_dimension_numbers<[1], [0], [0], [1], [0, 0, 1, 1], [], []>} : vector<2x32xf32>, vector<32x128xf32>, vector<2x128xf32> -> vector<2x128xf32>
    %69 = arith.addf %67, %68 : vector<2x128xf32>
    %70 = math.tanh %69 : vector<2x128xf32>
    %71 = vector.extract_strided_slice %70 {offsets = [0, 0], sizes = [2, 32], strides = [1, 1]} : vector<2x128xf32> to vector<2x32xf32>
    %cst_28 = arith.constant 1.000000e+00 : f32
    %72 = vector.broadcast %cst_28 : f32 to vector<2x32xf32>
    %73 = arith.addf %71, %72 : vector<2x32xf32>
    %cst_29 = arith.constant 5.000000e-01 : f32
    %74 = vector.broadcast %cst_29 : f32 to vector<2x32xf32>
    %75 = arith.mulf %74, %73 : vector<2x32xf32>
    %76 = vector.extract_strided_slice %70 {offsets = [0, 32], sizes = [2, 32], strides = [1, 1]} : vector<2x128xf32> to vector<2x32xf32>
    %cst_30 = arith.constant 1.000000e+00 : f32
    %77 = vector.broadcast %cst_30 : f32 to vector<2x32xf32>
    %78 = arith.addf %76, %77 : vector<2x32xf32>
    %cst_31 = arith.constant 5.000000e-01 : f32
    %79 = vector.broadcast %cst_31 : f32 to vector<2x32xf32>
    %80 = arith.mulf %79, %78 : vector<2x32xf32>
    %81 = vector.extract_strided_slice %70 {offsets = [0, 64], sizes = [2, 32], strides = [1, 1]} : vector<2x128xf32> to vector<2x32xf32>
    %82 = vector.extract_strided_slice %70 {offsets = [0, 96], sizes = [2, 32], strides = [1, 1]} : vector<2x128xf32> to vector<2x32xf32>
    %cst_32 = arith.constant 1.000000e+00 : f32
    %83 = vector.broadcast %cst_32 : f32 to vector<2x32xf32>
    %84 = arith.addf %82, %83 : vector<2x32xf32>
    %cst_33 = arith.constant 5.000000e-01 : f32
    %85 = vector.broadcast %cst_33 : f32 to vector<2x32xf32>
    %86 = arith.mulf %85, %84 : vector<2x32xf32>
    %87 = arith.mulf %80, %63 : vector<2x32xf32>
    %88 = arith.mulf %75, %81 : vector<2x32xf32>
    %89 = arith.addf %87, %88 : vector<2x32xf32>
    %90 = math.tanh %89 : vector<2x32xf32>
    %91 = arith.mulf %86, %90 : vector<2x32xf32>
    %cst_34 = arith.constant dense<0.000000e+00> : vector<2x16xf32>
    %92 = tpu.matmul %91, %12, %cst_34 {dimension_numbers = #tpu.dot_dimension_numbers<[1], [0], [0], [1], [0, 0, 1, 1], [], []>} : vector<2x32xf32>, vector<32x16xf32>, vector<2x16xf32> -> vector<2x16xf32>
    %93 = vector.extract_strided_slice %10 {offsets = [6, 0], sizes = [2, 128], strides = [1, 1]} : vector<16x128xf32> to vector<2x128xf32>
    %cst_35 = arith.constant dense<0.000000e+00> : vector<2x128xf32>
    %94 = tpu.matmul %91, %11, %cst_35 {dimension_numbers = #tpu.dot_dimension_numbers<[1], [0], [0], [1], [0, 0, 1, 1], [], []>} : vector<2x32xf32>, vector<32x128xf32>, vector<2x128xf32> -> vector<2x128xf32>
    %95 = arith.addf %93, %94 : vector<2x128xf32>
    %96 = math.tanh %95 : vector<2x128xf32>
    %97 = vector.extract_strided_slice %96 {offsets = [0, 0], sizes = [2, 32], strides = [1, 1]} : vector<2x128xf32> to vector<2x32xf32>
    %cst_36 = arith.constant 1.000000e+00 : f32
    %98 = vector.broadcast %cst_36 : f32 to vector<2x32xf32>
    %99 = arith.addf %97, %98 : vector<2x32xf32>
    %cst_37 = arith.constant 5.000000e-01 : f32
    %100 = vector.broadcast %cst_37 : f32 to vector<2x32xf32>
    %101 = arith.mulf %100, %99 : vector<2x32xf32>
    %102 = vector.extract_strided_slice %96 {offsets = [0, 32], sizes = [2, 32], strides = [1, 1]} : vector<2x128xf32> to vector<2x32xf32>
    %cst_38 = arith.constant 1.000000e+00 : f32
    %103 = vector.broadcast %cst_38 : f32 to vector<2x32xf32>
    %104 = arith.addf %102, %103 : vector<2x32xf32>
    %cst_39 = arith.constant 5.000000e-01 : f32
    %105 = vector.broadcast %cst_39 : f32 to vector<2x32xf32>
    %106 = arith.mulf %105, %104 : vector<2x32xf32>
    %107 = vector.extract_strided_slice %96 {offsets = [0, 64], sizes = [2, 32], strides = [1, 1]} : vector<2x128xf32> to vector<2x32xf32>
    %108 = vector.extract_strided_slice %96 {offsets = [0, 96], sizes = [2, 32], strides = [1, 1]} : vector<2x128xf32> to vector<2x32xf32>
    %cst_40 = arith.constant 1.000000e+00 : f32
    %109 = vector.broadcast %cst_40 : f32 to vector<2x32xf32>
    %110 = arith.addf %108, %109 : vector<2x32xf32>
    %cst_41 = arith.constant 5.000000e-01 : f32
    %111 = vector.broadcast %cst_41 : f32 to vector<2x32xf32>
    %112 = arith.mulf %111, %110 : vector<2x32xf32>
    %113 = arith.mulf %106, %89 : vector<2x32xf32>
    %114 = arith.mulf %101, %107 : vector<2x32xf32>
    %115 = arith.addf %113, %114 : vector<2x32xf32>
    %116 = math.tanh %115 : vector<2x32xf32>
    %117 = arith.mulf %112, %116 : vector<2x32xf32>
    %cst_42 = arith.constant dense<0.000000e+00> : vector<2x16xf32>
    %118 = tpu.matmul %117, %12, %cst_42 {dimension_numbers = #tpu.dot_dimension_numbers<[1], [0], [0], [1], [0, 0, 1, 1], [], []>} : vector<2x32xf32>, vector<32x16xf32>, vector<2x16xf32> -> vector<2x16xf32>
    %119 = vector.extract_strided_slice %10 {offsets = [8, 0], sizes = [2, 128], strides = [1, 1]} : vector<16x128xf32> to vector<2x128xf32>
    %cst_43 = arith.constant dense<0.000000e+00> : vector<2x128xf32>
    %120 = tpu.matmul %117, %11, %cst_43 {dimension_numbers = #tpu.dot_dimension_numbers<[1], [0], [0], [1], [0, 0, 1, 1], [], []>} : vector<2x32xf32>, vector<32x128xf32>, vector<2x128xf32> -> vector<2x128xf32>
    %121 = arith.addf %119, %120 : vector<2x128xf32>
    %122 = math.tanh %121 : vector<2x128xf32>
    %123 = vector.extract_strided_slice %122 {offsets = [0, 0], sizes = [2, 32], strides = [1, 1]} : vector<2x128xf32> to vector<2x32xf32>
    %cst_44 = arith.constant 1.000000e+00 : f32
    %124 = vector.broadcast %cst_44 : f32 to vector<2x32xf32>
    %125 = arith.addf %123, %124 : vector<2x32xf32>
    %cst_45 = arith.constant 5.000000e-01 : f32
    %126 = vector.broadcast %cst_45 : f32 to vector<2x32xf32>
    %127 = arith.mulf %126, %125 : vector<2x32xf32>
    %128 = vector.extract_strided_slice %122 {offsets = [0, 32], sizes = [2, 32], strides = [1, 1]} : vector<2x128xf32> to vector<2x32xf32>
    %cst_46 = arith.constant 1.000000e+00 : f32
    %129 = vector.broadcast %cst_46 : f32 to vector<2x32xf32>
    %130 = arith.addf %128, %129 : vector<2x32xf32>
    %cst_47 = arith.constant 5.000000e-01 : f32
    %131 = vector.broadcast %cst_47 : f32 to vector<2x32xf32>
    %132 = arith.mulf %131, %130 : vector<2x32xf32>
    %133 = vector.extract_strided_slice %122 {offsets = [0, 64], sizes = [2, 32], strides = [1, 1]} : vector<2x128xf32> to vector<2x32xf32>
    %134 = vector.extract_strided_slice %122 {offsets = [0, 96], sizes = [2, 32], strides = [1, 1]} : vector<2x128xf32> to vector<2x32xf32>
    %cst_48 = arith.constant 1.000000e+00 : f32
    %135 = vector.broadcast %cst_48 : f32 to vector<2x32xf32>
    %136 = arith.addf %134, %135 : vector<2x32xf32>
    %cst_49 = arith.constant 5.000000e-01 : f32
    %137 = vector.broadcast %cst_49 : f32 to vector<2x32xf32>
    %138 = arith.mulf %137, %136 : vector<2x32xf32>
    %139 = arith.mulf %132, %115 : vector<2x32xf32>
    %140 = arith.mulf %127, %133 : vector<2x32xf32>
    %141 = arith.addf %139, %140 : vector<2x32xf32>
    %142 = math.tanh %141 : vector<2x32xf32>
    %143 = arith.mulf %138, %142 : vector<2x32xf32>
    %cst_50 = arith.constant dense<0.000000e+00> : vector<2x16xf32>
    %144 = tpu.matmul %143, %12, %cst_50 {dimension_numbers = #tpu.dot_dimension_numbers<[1], [0], [0], [1], [0, 0, 1, 1], [], []>} : vector<2x32xf32>, vector<32x16xf32>, vector<2x16xf32> -> vector<2x16xf32>
    %145 = vector.extract_strided_slice %10 {offsets = [10, 0], sizes = [2, 128], strides = [1, 1]} : vector<16x128xf32> to vector<2x128xf32>
    %cst_51 = arith.constant dense<0.000000e+00> : vector<2x128xf32>
    %146 = tpu.matmul %143, %11, %cst_51 {dimension_numbers = #tpu.dot_dimension_numbers<[1], [0], [0], [1], [0, 0, 1, 1], [], []>} : vector<2x32xf32>, vector<32x128xf32>, vector<2x128xf32> -> vector<2x128xf32>
    %147 = arith.addf %145, %146 : vector<2x128xf32>
    %148 = math.tanh %147 : vector<2x128xf32>
    %149 = vector.extract_strided_slice %148 {offsets = [0, 0], sizes = [2, 32], strides = [1, 1]} : vector<2x128xf32> to vector<2x32xf32>
    %cst_52 = arith.constant 1.000000e+00 : f32
    %150 = vector.broadcast %cst_52 : f32 to vector<2x32xf32>
    %151 = arith.addf %149, %150 : vector<2x32xf32>
    %cst_53 = arith.constant 5.000000e-01 : f32
    %152 = vector.broadcast %cst_53 : f32 to vector<2x32xf32>
    %153 = arith.mulf %152, %151 : vector<2x32xf32>
    %154 = vector.extract_strided_slice %148 {offsets = [0, 32], sizes = [2, 32], strides = [1, 1]} : vector<2x128xf32> to vector<2x32xf32>
    %cst_54 = arith.constant 1.000000e+00 : f32
    %155 = vector.broadcast %cst_54 : f32 to vector<2x32xf32>
    %156 = arith.addf %154, %155 : vector<2x32xf32>
    %cst_55 = arith.constant 5.000000e-01 : f32
    %157 = vector.broadcast %cst_55 : f32 to vector<2x32xf32>
    %158 = arith.mulf %157, %156 : vector<2x32xf32>
    %159 = vector.extract_strided_slice %148 {offsets = [0, 64], sizes = [2, 32], strides = [1, 1]} : vector<2x128xf32> to vector<2x32xf32>
    %160 = vector.extract_strided_slice %148 {offsets = [0, 96], sizes = [2, 32], strides = [1, 1]} : vector<2x128xf32> to vector<2x32xf32>
    %cst_56 = arith.constant 1.000000e+00 : f32
    %161 = vector.broadcast %cst_56 : f32 to vector<2x32xf32>
    %162 = arith.addf %160, %161 : vector<2x32xf32>
    %cst_57 = arith.constant 5.000000e-01 : f32
    %163 = vector.broadcast %cst_57 : f32 to vector<2x32xf32>
    %164 = arith.mulf %163, %162 : vector<2x32xf32>
    %165 = arith.mulf %158, %141 : vector<2x32xf32>
    %166 = arith.mulf %153, %159 : vector<2x32xf32>
    %167 = arith.addf %165, %166 : vector<2x32xf32>
    %168 = math.tanh %167 : vector<2x32xf32>
    %169 = arith.mulf %164, %168 : vector<2x32xf32>
    %cst_58 = arith.constant dense<0.000000e+00> : vector<2x16xf32>
    %170 = tpu.matmul %169, %12, %cst_58 {dimension_numbers = #tpu.dot_dimension_numbers<[1], [0], [0], [1], [0, 0, 1, 1], [], []>} : vector<2x32xf32>, vector<32x16xf32>, vector<2x16xf32> -> vector<2x16xf32>
    %171 = vector.extract_strided_slice %10 {offsets = [12, 0], sizes = [2, 128], strides = [1, 1]} : vector<16x128xf32> to vector<2x128xf32>
    %cst_59 = arith.constant dense<0.000000e+00> : vector<2x128xf32>
    %172 = tpu.matmul %169, %11, %cst_59 {dimension_numbers = #tpu.dot_dimension_numbers<[1], [0], [0], [1], [0, 0, 1, 1], [], []>} : vector<2x32xf32>, vector<32x128xf32>, vector<2x128xf32> -> vector<2x128xf32>
    %173 = arith.addf %171, %172 : vector<2x128xf32>
    %174 = math.tanh %173 : vector<2x128xf32>
    %175 = vector.extract_strided_slice %174 {offsets = [0, 0], sizes = [2, 32], strides = [1, 1]} : vector<2x128xf32> to vector<2x32xf32>
    %cst_60 = arith.constant 1.000000e+00 : f32
    %176 = vector.broadcast %cst_60 : f32 to vector<2x32xf32>
    %177 = arith.addf %175, %176 : vector<2x32xf32>
    %cst_61 = arith.constant 5.000000e-01 : f32
    %178 = vector.broadcast %cst_61 : f32 to vector<2x32xf32>
    %179 = arith.mulf %178, %177 : vector<2x32xf32>
    %180 = vector.extract_strided_slice %174 {offsets = [0, 32], sizes = [2, 32], strides = [1, 1]} : vector<2x128xf32> to vector<2x32xf32>
    %cst_62 = arith.constant 1.000000e+00 : f32
    %181 = vector.broadcast %cst_62 : f32 to vector<2x32xf32>
    %182 = arith.addf %180, %181 : vector<2x32xf32>
    %cst_63 = arith.constant 5.000000e-01 : f32
    %183 = vector.broadcast %cst_63 : f32 to vector<2x32xf32>
    %184 = arith.mulf %183, %182 : vector<2x32xf32>
    %185 = vector.extract_strided_slice %174 {offsets = [0, 64], sizes = [2, 32], strides = [1, 1]} : vector<2x128xf32> to vector<2x32xf32>
    %186 = vector.extract_strided_slice %174 {offsets = [0, 96], sizes = [2, 32], strides = [1, 1]} : vector<2x128xf32> to vector<2x32xf32>
    %cst_64 = arith.constant 1.000000e+00 : f32
    %187 = vector.broadcast %cst_64 : f32 to vector<2x32xf32>
    %188 = arith.addf %186, %187 : vector<2x32xf32>
    %cst_65 = arith.constant 5.000000e-01 : f32
    %189 = vector.broadcast %cst_65 : f32 to vector<2x32xf32>
    %190 = arith.mulf %189, %188 : vector<2x32xf32>
    %191 = arith.mulf %184, %167 : vector<2x32xf32>
    %192 = arith.mulf %179, %185 : vector<2x32xf32>
    %193 = arith.addf %191, %192 : vector<2x32xf32>
    %194 = math.tanh %193 : vector<2x32xf32>
    %195 = arith.mulf %190, %194 : vector<2x32xf32>
    %cst_66 = arith.constant dense<0.000000e+00> : vector<2x16xf32>
    %196 = tpu.matmul %195, %12, %cst_66 {dimension_numbers = #tpu.dot_dimension_numbers<[1], [0], [0], [1], [0, 0, 1, 1], [], []>} : vector<2x32xf32>, vector<32x16xf32>, vector<2x16xf32> -> vector<2x16xf32>
    %197 = vector.extract_strided_slice %10 {offsets = [14, 0], sizes = [2, 128], strides = [1, 1]} : vector<16x128xf32> to vector<2x128xf32>
    %cst_67 = arith.constant dense<0.000000e+00> : vector<2x128xf32>
    %198 = tpu.matmul %195, %11, %cst_67 {dimension_numbers = #tpu.dot_dimension_numbers<[1], [0], [0], [1], [0, 0, 1, 1], [], []>} : vector<2x32xf32>, vector<32x128xf32>, vector<2x128xf32> -> vector<2x128xf32>
    %199 = arith.addf %197, %198 : vector<2x128xf32>
    %200 = math.tanh %199 : vector<2x128xf32>
    %201 = vector.extract_strided_slice %200 {offsets = [0, 0], sizes = [2, 32], strides = [1, 1]} : vector<2x128xf32> to vector<2x32xf32>
    %cst_68 = arith.constant 1.000000e+00 : f32
    %202 = vector.broadcast %cst_68 : f32 to vector<2x32xf32>
    %203 = arith.addf %201, %202 : vector<2x32xf32>
    %cst_69 = arith.constant 5.000000e-01 : f32
    %204 = vector.broadcast %cst_69 : f32 to vector<2x32xf32>
    %205 = arith.mulf %204, %203 : vector<2x32xf32>
    %206 = vector.extract_strided_slice %200 {offsets = [0, 32], sizes = [2, 32], strides = [1, 1]} : vector<2x128xf32> to vector<2x32xf32>
    %cst_70 = arith.constant 1.000000e+00 : f32
    %207 = vector.broadcast %cst_70 : f32 to vector<2x32xf32>
    %208 = arith.addf %206, %207 : vector<2x32xf32>
    %cst_71 = arith.constant 5.000000e-01 : f32
    %209 = vector.broadcast %cst_71 : f32 to vector<2x32xf32>
    %210 = arith.mulf %209, %208 : vector<2x32xf32>
    %211 = vector.extract_strided_slice %200 {offsets = [0, 64], sizes = [2, 32], strides = [1, 1]} : vector<2x128xf32> to vector<2x32xf32>
    %212 = vector.extract_strided_slice %200 {offsets = [0, 96], sizes = [2, 32], strides = [1, 1]} : vector<2x128xf32> to vector<2x32xf32>
    %cst_72 = arith.constant 1.000000e+00 : f32
    %213 = vector.broadcast %cst_72 : f32 to vector<2x32xf32>
    %214 = arith.addf %212, %213 : vector<2x32xf32>
    %cst_73 = arith.constant 5.000000e-01 : f32
    %215 = vector.broadcast %cst_73 : f32 to vector<2x32xf32>
    %216 = arith.mulf %215, %214 : vector<2x32xf32>
    %217 = arith.mulf %210, %193 : vector<2x32xf32>
    %218 = arith.mulf %205, %211 : vector<2x32xf32>
    %219 = arith.addf %217, %218 : vector<2x32xf32>
    %220 = math.tanh %219 : vector<2x32xf32>
    %221 = arith.mulf %216, %220 : vector<2x32xf32>
    %cst_74 = arith.constant dense<0.000000e+00> : vector<2x16xf32>
    %222 = tpu.matmul %221, %12, %cst_74 {dimension_numbers = #tpu.dot_dimension_numbers<[1], [0], [0], [1], [0, 0, 1, 1], [], []>} : vector<2x32xf32>, vector<32x16xf32>, vector<2x16xf32> -> vector<2x16xf32>
    %223 = tpu.concatenate %40, %66, %92, %118, %144, %170, %196, %222 in 1 : vector<2x16xf32>, vector<2x16xf32>, vector<2x16xf32>, vector<2x16xf32>, vector<2x16xf32>, vector<2x16xf32>, vector<2x16xf32>, vector<2x16xf32> -> vector<2x128xf32>
    %c0_75 = arith.constant 0 : index
    %c0_76 = arith.constant 0 : index
    %224 = vector.load %arg5[%c0_75, %c0_76] : memref<1x128xf32, #tpu.memory_space<vmem>>, vector<1x128xf32>
    %225 = vector.broadcast %224 : vector<1x128xf32> to vector<2x128xf32>
    %226 = arith.addf %223, %225 : vector<2x128xf32>
    %c0_77 = arith.constant 0 : index
    %c0_78 = arith.constant 0 : index
    %227 = vector.load %arg6[%c0_77, %c0_78] : memref<2x128xf32, #tpu.memory_space<vmem>>, vector<2x128xf32>
    tpu.vector_store %arg6[%c0_77, %c0_78], %226 {strides = array<i32>} : memref<2x128xf32, #tpu.memory_space<vmem>>, vector<2x128xf32>,
    return
  }
}

</mosaic_0001>

<llo_original>
// kernel: tile.8
$region0: #{tile.8}
  #allocation0 [shape = 's32[1]{0}', space=sflag, size = 0x4, scoped, tag = 'scoped memory for tile.8']
  %s0 = inlined_call_operand.vmem [shape: f32[16], index: 0, kind: input, shape index: {}]
  %s1 = inlined_call_operand.vmem [shape: f32[8,16], index: 1, kind: output, shape index: {}]
  // Predicated region
  $region2: #{tile.8} parent=0 // pred_check
    _
  $region3: #{tile.8} parent=0 // pred_check_branch
    %3 = sbr.rel (0) target = $region5
  $region4: #{tile.8} parent=0 // pred_region
    _
  $region5: #{tile.8} parent=0 // pred_fallthru
    _
  %v4 = vld [vmem:[%s0] ss:$0 sm:$0xff]
  %5 = vst [vmem:[%s1] sm:$0xff] %v4

// kernel: tile.9
$region0: #{tile.9}
  %s0 = inlined_call_operand.vmem [shape: f32[8,16], index: 0, kind: input, shape index: {}]
  %s1 = inlined_call_operand.vmem [shape: f32[1,128], index: 1, kind: output, shape index: {}]
  $region1: #{tile.9} parent=0
    #allocation0 [shape = 'u8[4096]{0}', space=vmem, size = 0x1000, scoped, tag = 'scoped mem for output reshape']
    %v2 = vld [vmem:[%s0] sm:$0x1]
    %vm3 = vcmask 130048
    %4 = vst.msk [vmem:[#allocation0] sm:$0x1] %vm3, %v2
    %s5 = scalar_lea.vmem %s0, 7
    %v6 = vld [vmem:[%s5] sm:$0x1]
    %7 = vrot.lane.b32.xlu0 %v6, 112
    %v8 = vpop.permute.xlu0 %7
    %vm9 = vcmask 1048448
    %10 = vst.msk [vmem:[#allocation0] sm:$0x1] %vm9, %v8
    %s11 = scalar_lea.vmem %s0, 6
    %v12 = vld [vmem:[%s11] sm:$0x1]
    %13 = vrot.lane.b32.xlu0 %v12, 96
    %v14 = vpop.permute.xlu0 %13
    %vm15 = vcmask 917248
    %16 = vst.msk [vmem:[#allocation0] sm:$0x1] %vm15, %v14
    %s17 = scalar_lea.vmem %s0, 5
    %v18 = vld [vmem:[%s17] sm:$0x1]
    %19 = vrot.lane.b32.xlu0 %v18, 80
    %v20 = vpop.permute.xlu0 %19
    %vm21 = vcmask 786048
    %22 = vst.msk [vmem:[#allocation0] sm:$0x1] %vm21, %v20
    %s23 = scalar_lea.vmem %s0, 4
    %v24 = vld [vmem:[%s23] sm:$0x1]
    %25 = vrot.lane.b32.xlu0 %v24, 64
    %v26 = vpop.permute.xlu0 %25
    %vm27 = vcmask 654848
    %28 = vst.msk [vmem:[#allocation0] sm:$0x1] %vm27, %v26
    %s29 = scalar_lea.vmem %s0, 3
    %v30 = vld [vmem:[%s29] sm:$0x1]
    %31 = vrot.lane.b32.xlu0 %v30, 48
    %v32 = vpop.permute.xlu0 %31
    %vm33 = vcmask 523648
    %34 = vst.msk [vmem:[#allocation0] sm:$0x1] %vm33, %v32
    %s35 = scalar_lea.vmem %s0, 2
    %v36 = vld [vmem:[%s35] sm:$0x1]
    %37 = vrot.lane.b32.xlu0 %v36, 32
    %v38 = vpop.permute.xlu0 %37
    %vm39 = vcmask 392448
    %40 = vst.msk [vmem:[#allocation0] sm:$0x1] %vm39, %v38
    %s41 = scalar_lea.vmem %s0, 1
    %v42 = vld [vmem:[%s41] sm:$0x1]
    %43 = vrot.lane.b32.xlu0 %v42, 16
    %v44 = vpop.permute.xlu0 %43
    %vm45 = vcmask 261248
    %46 = vst.msk [vmem:[#allocation0] sm:$0x1] %vm45, %v44
    %s48 = sshllo.u32 0, 1
    %v50 = vld [vmem:[#allocation0] sm:%s48]
    %s51 = sshllo.u32 0, 1
    %52 = vst [vmem:[%s1] sm:%s51] %v50

// kernel: rnn_m2m_forward.1
$region0: #{rnn_m2m_forward.1}
  #allocation0 [shape = 'u32[]', space=smem, size = 0x4, offset = 0x4, fixed_abs, tag = 'smem constant byte address 0x4 - core index']
  #allocation1 [shape = 'u32[144,128]{1,0:T(1,128)}', space=vmem, size = 0x12000, scoped, tag = 'internal scratch']
  %s0 = inlined_call_operand.vmem [shape: s32[16,1], index: 0, kind: input, shape index: {}]
  %s1 = inlined_call_operand.vmem [shape: f32[16,128], index: 1, kind: input, shape index: {}]
  %s2 = inlined_call_operand.vmem [shape: f32[32,128], index: 2, kind: input, shape index: {}]
  %s3 = inlined_call_operand.vmem [shape: f32[1,128], index: 3, kind: input, shape index: {}]
  %s4 = inlined_call_operand.vmem [shape: f32[32,16], index: 4, kind: input, shape index: {}]
  %s5 = inlined_call_operand.vmem [shape: f32[1,128], index: 5, kind: input, shape index: {}]
  %s6 = inlined_call_operand.vmem [shape: f32[2,128], index: 6, kind: output, shape index: {}]
  %s7 = sld [smem:[#allocation0]]
  $region34: #{rnn_m2m_forward.1} parent=0
    _
  %s9 = ssub.s32 1, %s7
  %s10 = scalar_select 0, %s9, %s7
  // Predicated region
  $region2: #{rnn_m2m_forward.1} parent=0 // pred_check
    _
  $region3: #{rnn_m2m_forward.1} parent=0 // pred_check_branch
    %12 = sbr.rel (0) target = $region5
  $region4: #{rnn_m2m_forward.1} parent=0 // pred_region
    _
  $region5: #{rnn_m2m_forward.1} parent=0 // pred_fallthru
    _
  // Predicated region
  $region6: #{rnn_m2m_forward.1} parent=0 // pred_check
    _
  $region7: #{rnn_m2m_forward.1} parent=0 // pred_check_branch
    %14 = sbr.rel (0) target = $region9
  $region8: #{rnn_m2m_forward.1} parent=0 // pred_region
    _
  $region9: #{rnn_m2m_forward.1} parent=0 // pred_fallthru
    _
  // Predicated region
  $region10: #{rnn_m2m_forward.1} parent=0 // pred_check
    _
  $region11: #{rnn_m2m_forward.1} parent=0 // pred_check_branch
    %16 = sbr.rel (0) target = $region13
  $region12: #{rnn_m2m_forward.1} parent=0 // pred_region
    _
  $region13: #{rnn_m2m_forward.1} parent=0 // pred_fallthru
    _
  // Predicated region
  $region14: #{rnn_m2m_forward.1} parent=0 // pred_check
    _
  $region15: #{rnn_m2m_forward.1} parent=0 // pred_check_branch
    %18 = sbr.rel (0) target = $region17
  $region16: #{rnn_m2m_forward.1} parent=0 // pred_region
    _
  $region17: #{rnn_m2m_forward.1} parent=0 // pred_fallthru
    _
  // Predicated region
  $region18: #{rnn_m2m_forward.1} parent=0 // pred_check
    _
  $region19: #{rnn_m2m_forward.1} parent=0 // pred_check_branch
    %20 = sbr.rel (0) target = $region21
  $region20: #{rnn_m2m_forward.1} parent=0 // pred_region
    _
  $region21: #{rnn_m2m_forward.1} parent=0 // pred_fallthru
    _
  // Predicated region
  $region22: #{rnn_m2m_forward.1} parent=0 // pred_check
    _
  $region23: #{rnn_m2m_forward.1} parent=0 // pred_check_branch
    %22 = sbr.rel (0) target = $region25
  $region24: #{rnn_m2m_forward.1} parent=0 // pred_region
    _
  $region25: #{rnn_m2m_forward.1} parent=0 // pred_fallthru
    _
  %v23 = vld [vmem:[%s0] sm:$0xff]
  %v24 = vld [vmem:[%s0 + $0x8] sm:$0xff]
  %v25 = vlaneseq
  %v26 = vand.u32 %v25, 127
  %27 = vset.pattern.permute.xlu0 0
  %28 = vperm.xlu0 %27, %v23
  %v29 = vpop.permute.xlu0 %28
  %30 = vset.pattern.permute.xlu0 0
  %31 = vperm.xlu0 %30, %v24
  %v32 = vpop.permute.xlu0 %31
  %vm33 = vcmp.eq.s32.totalorder %v29, %v26
  %vm34 = vcmp.eq.s32.totalorder %v32, %v26
  %v35 = vsel %vm33, 1, 0
  %v36 = vsel %vm34, 1, 0
  %v37 = vcvt.s32.f32 %v35
  %v38 = vcvt.s32.f32 %v36
  %v39 = vld [vmem:[%s1] sm:$0xff]
  %v40 = vld [vmem:[%s1 + $0x8] sm:$0xff]
  %v41 = vld [vmem:[%s3] sm:$0x1]
  %v43 = vlaneseq
  %v44 = vshrl.u32 %v43, 7
  %v45 = vsub.s32 0, %v44
  %v46 = vrot.slane %v41, %v45
  %vm48 = vcmask 130048
  %v50 = vsel %vm48, %v37, 0
  %v53 = vsel %vm48, %v38, 0
  %55 = vmatprep.subr.mxu0 0.0
  %56 = vmatpush1.msra.mxu0 %v39
  %57 = vmatprep.subr.mxu0 0.0
  %58 = vmatpush1.msra.mxu0 %v40
  %59 = vmatprep.subr.mxu0 0.0
  %60 = vmatpush1.msra.mxu0 0.0
  %61 = vmatprep.subr.mxu0 0.0
  %62 = vmatpush1.msra.mxu0 0.0
  %63 = vmatprep.subr.mxu0 0.0
  %64 = vmatpush1.msra.mxu0 0.0
  %65 = vmatprep.subr.mxu0 0.0
  %66 = vmatpush1.msra.mxu0 0.0
  %67 = vmatprep.subr.mxu0 0.0
  %68 = vmatpush1.msra.mxu0 0.0
  %69 = vmatprep.subr.mxu0 0.0
  %70 = vmatpush1.msra.mxu0 0.0
  %71 = vmatprep.subr.mxu0 0.0
  %72 = vmatpush1.msra.mxu0 0.0
  %73 = vmatprep.subr.mxu0 0.0
  %74 = vmatpush1.msra.mxu0 0.0
  %75 = vmatprep.subr.mxu0 0.0
  %76 = vmatpush1.msra.mxu0 0.0
  %77 = vmatprep.subr.mxu0 0.0
  %78 = vmatpush1.msra.mxu0 0.0
  %79 = vmatprep.subr.mxu0 0.0
  %80 = vmatpush1.msra.mxu0 0.0
  %81 = vmatprep.subr.mxu0 0.0
  %82 = vmatpush1.msra.mxu0 0.0
  %83 = vmatprep.subr.mxu0 0.0
  %84 = vmatpush1.msra.mxu0 0.0
  %85 = vmatprep.subr.mxu0 0.0
  %86 = vmatpush1.msra.mxu0 0.0
  %87 = vmatprep.subr.mxu0 0.0
  %88 = vmatpush1.msra.mxu0 0.0
  %89 = vmatprep.subr.mxu0 0.0
  %90 = vmatpush1.msra.mxu0 0.0
  %91 = vmatprep.subr.mxu0 0.0
  %92 = vmatpush1.msra.mxu0 0.0
  %93 = vmatprep.subr.mxu0 0.0
  %94 = vmatpush1.msra.mxu0 0.0
  %95 = vmatprep.subr.mxu0 0.0
  %96 = vmatpush1.msra.mxu0 0.0
  %97 = vmatprep.subr.mxu0 0.0
  %98 = vmatpush1.msra.mxu0 0.0
  %99 = vmatprep.subr.mxu0 0.0
  %100 = vmatpush1.msra.mxu0 0.0
  %101 = vmatprep.subr.mxu0 0.0
  %102 = vmatpush1.msra.mxu0 0.0
  %103 = vmatprep.subr.mxu0 0.0
  %104 = vmatpush1.msra.mxu0 0.0
  %105 = vmatprep.subr.mxu0 0.0
  %106 = vmatpush1.msra.mxu0 0.0
  %107 = vmatprep.subr.mxu0 0.0
  %108 = vmatpush1.msra.mxu0 0.0
  %109 = vmatprep.subr.mxu0 0.0
  %110 = vmatpush1.msra.mxu0 0.0
  %111 = vmatprep.subr.mxu0 0.0
  %112 = vmatpush1.msra.mxu0 0.0
  %113 = vmatprep.subr.mxu0 0.0
  %114 = vmatpush1.msra.mxu0 0.0
  %115 = vmatprep.subr.mxu0 0.0
  %116 = vmatpush1.msra.mxu0 0.0
  %117 = vmatprep.subr.mxu0 0.0
  %118 = vmatpush1.msra.mxu0 0.0
  %119 = vmatprep.mubr.f32.mxu0 0.0
  %120 = vmatmul.mubr.f32.gmra.mrb[0].mxu0 %v50
  %v121 = vpop.f32.mrb[0].mxu0
  %v122 = vadd.f32 %v46, %v121
  %v123 = vpop.f32.mrb[0].mxu0
  %124 = vmatprep.mubr.f32.mxu0 0.0
  %125 = vmatmul.mubr.f32.gmra.mrb[0].mxu0 %v53
  %v126 = vpop.f32.mrb[0].mxu0
  %v127 = vadd.f32 %v46, %v126
  %v128 = vpop.f32.mrb[0].mxu0
  %129 = vdwg.mxu0
  %v130 = vld [vmem:[%s2] sm:$0xff]
  %v131 = vld [vmem:[%s2 + $0x8] sm:$0xff]
  %v132 = vld [vmem:[%s2 + $0x10] sm:$0xff]
  %v133 = vld [vmem:[%s2 + $0x18] sm:$0xff]
  %v134 = vld [vmem:[%s4] sm:$0xff]
  %v135 = vld [vmem:[%s4 + $0x8] sm:$0xff]
  %v136 = vld [vmem:[%s4 + $0x10] sm:$0xff]
  %v137 = vld [vmem:[%s4 + $0x18] sm:$0xff]
  %vm138 = vcmask 261120
  %v140 = vsel %vm138, 0.0, 0
  %142 = vmatprep.subr.mxu0 0.0
  %143 = vmatpush1.msra.mxu0 %v130
  %144 = vmatprep.subr.mxu0 0.0
  %145 = vmatpush1.msra.mxu0 %v131
  %146 = vmatprep.subr.mxu0 0.0
  %147 = vmatpush1.msra.mxu0 %v132
  %148 = vmatprep.subr.mxu0 0.0
  %149 = vmatpush1.msra.mxu0 %v133
  %150 = vmatprep.subr.mxu0 0.0
  %151 = vmatpush1.msra.mxu0 0.0
  %152 = vmatprep.subr.mxu0 0.0
  %153 = vmatpush1.msra.mxu0 0.0
  %154 = vmatprep.subr.mxu0 0.0
  %155 = vmatpush1.msra.mxu0 0.0
  %156 = vmatprep.subr.mxu0 0.0
  %157 = vmatpush1.msra.mxu0 0.0
  %158 = vmatprep.subr.mxu0 0.0
  %159 = vmatpush1.msra.mxu0 0.0
  %160 = vmatprep.subr.mxu0 0.0
  %161 = vmatpush1.msra.mxu0 0.0
  %162 = vmatprep.subr.mxu0 0.0
  %163 = vmatpush1.msra.mxu0 0.0
  %164 = vmatprep.subr.mxu0 0.0
  %165 = vmatpush1.msra.mxu0 0.0
  %166 = vmatprep.subr.mxu0 0.0
  %167 = vmatpush1.msra.mxu0 0.0
  %168 = vmatprep.subr.mxu0 0.0
  %169 = vmatpush1.msra.mxu0 0.0
  %170 = vmatprep.subr.mxu0 0.0
  %171 = vmatpush1.msra.mxu0 0.0
  %172 = vmatprep.subr.mxu0 0.0
  %173 = vmatpush1.msra.mxu0 0.0
  %174 = vmatprep.subr.mxu0 0.0
  %175 = vmatpush1.msra.mxu0 0.0
  %176 = vmatprep.subr.mxu0 0.0
  %177 = vmatpush1.msra.mxu0 0.0
  %178 = vmatprep.subr.mxu0 0.0
  %179 = vmatpush1.msra.mxu0 0.0
  %180 = vmatprep.subr.mxu0 0.0
  %181 = vmatpush1.msra.mxu0 0.0
  %182 = vmatprep.subr.mxu0 0.0
  %183 = vmatpush1.msra.mxu0 0.0
  %184 = vmatprep.subr.mxu0 0.0
  %185 = vmatpush1.msra.mxu0 0.0
  %186 = vmatprep.subr.mxu0 0.0
  %187 = vmatpush1.msra.mxu0 0.0
  %188 = vmatprep.subr.mxu0 0.0
  %189 = vmatpush1.msra.mxu0 0.0
  %190 = vmatprep.subr.mxu0 0.0
  %191 = vmatpush1.msra.mxu0 0.0
  %192 = vmatprep.subr.mxu0 0.0
  %193 = vmatpush1.msra.mxu0 0.0
  %194 = vmatprep.subr.mxu0 0.0
  %195 = vmatpush1.msra.mxu0 0.0
  %196 = vmatprep.subr.mxu0 0.0
  %197 = vmatpush1.msra.mxu0 0.0
  %198 = vmatprep.subr.mxu0 0.0
  %199 = vmatpush1.msra.mxu0 0.0
  %200 = vmatprep.subr.mxu0 0.0
  %201 = vmatpush1.msra.mxu0 0.0
  %202 = vmatprep.subr.mxu0 0.0
  %203 = vmatpush1.msra.mxu0 0.0
  %204 = vmatprep.subr.mxu0 0.0
  %205 = vmatpush1.msra.mxu0 0.0
  %206 = vmatprep.mubr.f32.mxu0 0.0
  %207 = vmatmul.mubr.f32.gmra.mrb[0].mxu0 %v140
  %v208 = vpop.f32.mrb[0].mxu0
  %v209 = vadd.f32 0.0, %v208
  %v210 = vpop.f32.mrb[0].mxu0
  %211 = vdwg.mxu0
  %v212 = vadd.f32 %v122, %v209
  %v213 = vtanh.pop %v212
  %v214 = vadd.f32 %v213, 1.0
  %v215 = vmul.f32 %v214, 0.5
  %v216 = vmul.f32 %v215, 0.0
  %218 = vrot.lane.b32.xlu0 %v213, 64
  %v219 = vpop.permute.xlu0 %218
  %v221 = vmul.f32 %v215, %v219
  %223 = vrot.lane.b32.xlu0 %v221, 32
  %v224 = vpop.permute.xlu0 %223
  %v226 = vadd.f32 %v216, %v224
  %v227 = vtanh.pop %v226
  %229 = vrot.lane.b32.xlu0 %v227, 64
  %v230 = vpop.permute.xlu0 %229
  %v232 = vmul.f32 %v215, %v230
  %234 = vrot.lane.b32.xlu0 %v232, 32
  %v235 = vpop.permute.xlu0 %234
  %v236 = vsel %vm138, %v235, 0
  %238 = vmatprep.subr.mxu0 0.0
  %239 = vmatpush1.msra.mxu0 %v134
  %240 = vmatprep.subr.mxu0 0.0
  %241 = vmatpush1.msra.mxu0 %v135
  %242 = vmatprep.subr.mxu0 0.0
  %243 = vmatpush1.msra.mxu0 %v136
  %244 = vmatprep.subr.mxu0 0.0
  %245 = vmatpush1.msra.mxu0 %v137
  %246 = vmatprep.subr.mxu0 0.0
  %247 = vmatpush1.msra.mxu0 0.0
  %248 = vmatprep.subr.mxu0 0.0
  %249 = vmatpush1.msra.mxu0 0.0
  %250 = vmatprep.subr.mxu0 0.0
  %251 = vmatpush1.msra.mxu0 0.0
  %252 = vmatprep.subr.mxu0 0.0
  %253 = vmatpush1.msra.mxu0 0.0
  %254 = vmatprep.subr.mxu0 0.0
  %255 = vmatpush1.msra.mxu0 0.0
  %256 = vmatprep.subr.mxu0 0.0
  %257 = vmatpush1.msra.mxu0 0.0
  %258 = vmatprep.subr.mxu0 0.0
  %259 = vmatpush1.msra.mxu0 0.0
  %260 = vmatprep.subr.mxu0 0.0
  %261 = vmatpush1.msra.mxu0 0.0
  %262 = vmatprep.subr.mxu0 0.0
  %263 = vmatpush1.msra.mxu0 0.0
  %264 = vmatprep.subr.mxu0 0.0
  %265 = vmatpush1.msra.mxu0 0.0
  %266 = vmatprep.subr.mxu0 0.0
  %267 = vmatpush1.msra.mxu0 0.0
  %268 = vmatprep.subr.mxu0 0.0
  %269 = vmatpush1.msra.mxu0 0.0
  %270 = vmatprep.subr.mxu0 0.0
  %271 = vmatpush1.msra.mxu0 0.0
  %272 = vmatprep.subr.mxu0 0.0
  %273 = vmatpush1.msra.mxu0 0.0
  %274 = vmatprep.subr.mxu0 0.0
  %275 = vmatpush1.msra.mxu0 0.0
  %276 = vmatprep.subr.mxu0 0.0
  %277 = vmatpush1.msra.mxu0 0.0
  %278 = vmatprep.subr.mxu0 0.0
  %279 = vmatpush1.msra.mxu0 0.0
  %280 = vmatprep.subr.mxu0 0.0
  %281 = vmatpush1.msra.mxu0 0.0
  %282 = vmatprep.subr.mxu0 0.0
  %283 = vmatpush1.msra.mxu0 0.0
  %284 = vmatprep.subr.mxu0 0.0
  %285 = vmatpush1.msra.mxu0 0.0
  %286 = vmatprep.subr.mxu0 0.0
  %287 = vmatpush1.msra.mxu0 0.0
  %288 = vmatprep.subr.mxu0 0.0
  %289 = vmatpush1.msra.mxu0 0.0
  %290 = vmatprep.subr.mxu0 0.0
  %291 = vmatpush1.msra.mxu0 0.0
  %292 = vmatprep.subr.mxu0 0.0
  %293 = vmatpush1.msra.mxu0 0.0
  %294 = vmatprep.subr.mxu0 0.0
  %295 = vmatpush1.msra.mxu0 0.0
  %296 = vmatprep.subr.mxu0 0.0
  %297 = vmatpush1.msra.mxu0 0.0
  %298 = vmatprep.subr.mxu0 0.0
  %299 = vmatpush1.msra.mxu0 0.0
  %300 = vmatprep.subr.mxu0 0.0
  %301 = vmatpush1.msra.mxu0 0.0
  %302 = vmatprep.mubr.f32.mxu0 0.0
  %303 = vmatmul.mubr.f32.gmra.mrb[0].mxu0 %v236
  %v304 = vpop.f32.mrb[0].mxu0
  %v305 = vadd.f32 0.0, %v304
  %v306 = vpop.f32.mrb[0].mxu0
  %307 = vdwg.mxu0
  %308 = vmatprep.subr.mxu0 0.0
  %309 = vmatpush1.msra.mxu0 %v130
  %310 = vmatprep.subr.mxu0 0.0
  %311 = vmatpush1.msra.mxu0 %v131
  %312 = vmatprep.subr.mxu0 0.0
  %313 = vmatpush1.msra.mxu0 %v132
  %314 = vmatprep.subr.mxu0 0.0
  %315 = vmatpush1.msra.mxu0 %v133
  %316 = vmatprep.subr.mxu0 0.0
  %317 = vmatpush1.msra.mxu0 0.0
  %318 = vmatprep.subr.mxu0 0.0
  %319 = vmatpush1.msra.mxu0 0.0
  %320 = vmatprep.subr.mxu0 0.0
  %321 = vmatpush1.msra.mxu0 0.0
  %322 = vmatprep.subr.mxu0 0.0
  %323 = vmatpush1.msra.mxu0 0.0
  %324 = vmatprep.subr.mxu0 0.0
  %325 = vmatpush1.msra.mxu0 0.0
  %326 = vmatprep.subr.mxu0 0.0
  %327 = vmatpush1.msra.mxu0 0.0
  %328 = vmatprep.subr.mxu0 0.0
  %329 = vmatpush1.msra.mxu0 0.0
  %330 = vmatprep.subr.mxu0 0.0
  %331 = vmatpush1.msra.mxu0 0.0
  %332 = vmatprep.subr.mxu0 0.0
  %333 = vmatpush1.msra.mxu0 0.0
  %334 = vmatprep.subr.mxu0 0.0
  %335 = vmatpush1.msra.mxu0 0.0
  %336 = vmatprep.subr.mxu0 0.0
  %337 = vmatpush1.msra.mxu0 0.0
  %338 = vmatprep.subr.mxu0 0.0
  %339 = vmatpush1.msra.mxu0 0.0
  %340 = vmatprep.subr.mxu0 0.0
  %341 = vmatpush1.msra.mxu0 0.0
  %342 = vmatprep.subr.mxu0 0.0
  %343 = vmatpush1.msra.mxu0 0.0
  %344 = vmatprep.subr.mxu0 0.0
  %345 = vmatpush1.msra.mxu0 0.0
  %346 = vmatprep.subr.mxu0 0.0
  %347 = vmatpush1.msra.mxu0 0.0
  %348 = vmatprep.subr.mxu0 0.0
  %349 = vmatpush1.msra.mxu0 0.0
  %350 = vmatprep.subr.mxu0 0.0
  %351 = vmatpush1.msra.mxu0 0.0
  %352 = vmatprep.subr.mxu0 0.0
  %353 = vmatpush1.msra.mxu0 0.0
  %354 = vmatprep.subr.mxu0 0.0
  %355 = vmatpush1.msra.mxu0 0.0
  %356 = vmatprep.subr.mxu0 0.0
  %357 = vmatpush1.msra.mxu0 0.0
  %358 = vmatprep.subr.mxu0 0.0
  %359 = vmatpush1.msra.mxu0 0.0
  %360 = vmatprep.subr.mxu0 0.0
  %361 = vmatpush1.msra.mxu0 0.0
  %362 = vmatprep.subr.mxu0 0.0
  %363 = vmatpush1.msra.mxu0 0.0
  %364 = vmatprep.subr.mxu0 0.0
  %365 = vmatpush1.msra.mxu0 0.0
  %366 = vmatprep.subr.mxu0 0.0
  %367 = vmatpush1.msra.mxu0 0.0
  %368 = vmatprep.subr.mxu0 0.0
  %369 = vmatpush1.msra.mxu0 0.0
  %370 = vmatprep.subr.mxu0 0.0
  %371 = vmatpush1.msra.mxu0 0.0
  %372 = vmatprep.mubr.f32.mxu0 0.0
  %373 = vmatmul.mubr.f32.gmra.mrb[0].mxu0 %v236
  %v374 = vpop.f32.mrb[0].mxu0
  %v375 = vadd.f32 0.0, %v374
  %v376 = vpop.f32.mrb[0].mxu0
  %377 = vdwg.mxu0
  %v379 = vrot.slane %v375, 6
  %v381 = vadd.f32 %v122, %v379
  %v382 = vtanh.pop %v381
  %v383 = vadd.f32 %v382, 1.0
  %v384 = vmul.f32 %v383, 0.5
  %v386 = vrot.slane %v226, 6
  %v388 = vmul.f32 %v384, %v386
  %390 = vrot.lane.b32.xlu0 %v382, 64
  %v391 = vpop.permute.xlu0 %390
  %v393 = vmul.f32 %v384, %v391
  %395 = vrot.lane.b32.xlu0 %v393, 32
  %v396 = vpop.permute.xlu0 %395
  %v398 = vadd.f32 %v388, %v396
  %v399 = vtanh.pop %v398
  %401 = vrot.lane.b32.xlu0 %v399, 64
  %v402 = vpop.permute.xlu0 %401
  %v404 = vmul.f32 %v384, %v402
  %v406 = vrot.slane %v404, 2
  %407 = vrot.lane.b32.xlu0 %v406, 32
  %v408 = vpop.permute.xlu0 %407
  %v409 = vsel %vm138, %v408, 0
  %411 = vmatprep.subr.mxu0 0.0
  %412 = vmatpush1.msra.mxu0 %v134
  %413 = vmatprep.subr.mxu0 0.0
  %414 = vmatpush1.msra.mxu0 %v135
  %415 = vmatprep.subr.mxu0 0.0
  %416 = vmatpush1.msra.mxu0 %v136
  %417 = vmatprep.subr.mxu0 0.0
  %418 = vmatpush1.msra.mxu0 %v137
  %419 = vmatprep.subr.mxu0 0.0
  %420 = vmatpush1.msra.mxu0 0.0
  %421 = vmatprep.subr.mxu0 0.0
  %422 = vmatpush1.msra.mxu0 0.0
  %423 = vmatprep.subr.mxu0 0.0
  %424 = vmatpush1.msra.mxu0 0.0
  %425 = vmatprep.subr.mxu0 0.0
  %426 = vmatpush1.msra.mxu0 0.0
  %427 = vmatprep.subr.mxu0 0.0
  %428 = vmatpush1.msra.mxu0 0.0
  %429 = vmatprep.subr.mxu0 0.0
  %430 = vmatpush1.msra.mxu0 0.0
  %431 = vmatprep.subr.mxu0 0.0
  %432 = vmatpush1.msra.mxu0 0.0
  %433 = vmatprep.subr.mxu0 0.0
  %434 = vmatpush1.msra.mxu0 0.0
  %435 = vmatprep.subr.mxu0 0.0
  %436 = vmatpush1.msra.mxu0 0.0
  %437 = vmatprep.subr.mxu0 0.0
  %438 = vmatpush1.msra.mxu0 0.0
  %439 = vmatprep.subr.mxu0 0.0
  %440 = vmatpush1.msra.mxu0 0.0
  %441 = vmatprep.subr.mxu0 0.0
  %442 = vmatpush1.msra.mxu0 0.0
  %443 = vmatprep.subr.mxu0 0.0
  %444 = vmatpush1.msra.mxu0 0.0
  %445 = vmatprep.subr.mxu0 0.0
  %446 = vmatpush1.msra.mxu0 0.0
  %447 = vmatprep.subr.mxu0 0.0
  %448 = vmatpush1.msra.mxu0 0.0
  %449 = vmatprep.subr.mxu0 0.0
  %450 = vmatpush1.msra.mxu0 0.0
  %451 = vmatprep.subr.mxu0 0.0
  %452 = vmatpush1.msra.mxu0 0.0
  %453 = vmatprep.subr.mxu0 0.0
  %454 = vmatpush1.msra.mxu0 0.0
  %455 = vmatprep.subr.mxu0 0.0
  %456 = vmatpush1.msra.mxu0 0.0
  %457 = vmatprep.subr.mxu0 0.0
  %458 = vmatpush1.msra.mxu0 0.0
  %459 = vmatprep.subr.mxu0 0.0
  %460 = vmatpush1.msra.mxu0 0.0
  %461 = vmatprep.subr.mxu0 0.0
  %462 = vmatpush1.msra.mxu0 0.0
  %463 = vmatprep.subr.mxu0 0.0
  %464 = vmatpush1.msra.mxu0 0.0
  %465 = vmatprep.subr.mxu0 0.0
  %466 = vmatpush1.msra.mxu0 0.0
  %467 = vmatprep.subr.mxu0 0.0
  %468 = vmatpush1.msra.mxu0 0.0
  %469 = vmatprep.subr.mxu0 0.0
  %470 = vmatpush1.msra.mxu0 0.0
  %471 = vmatprep.subr.mxu0 0.0
  %472 = vmatpush1.msra.mxu0 0.0
  %473 = vmatprep.subr.mxu0 0.0
  %474 = vmatpush1.msra.mxu0 0.0
  %475 = vmatprep.mubr.f32.mxu0 0.0
  %476 = vmatmul.mubr.f32.gmra.mrb[0].mxu0 %v409
  %v477 = vpop.f32.mrb[0].mxu0
  %v478 = vadd.f32 0.0, %v477
  %v479 = vpop.f32.mrb[0].mxu0
  %480 = vdwg.mxu0
  %481 = vmatprep.subr.mxu0 0.0
  %482 = vmatpush1.msra.mxu0 %v130
  %483 = vmatprep.subr.mxu0 0.0
  %484 = vmatpush1.msra.mxu0 %v131
  %485 = vmatprep.subr.mxu0 0.0
  %486 = vmatpush1.msra.mxu0 %v132
  %487 = vmatprep.subr.mxu0 0.0
  %488 = vmatpush1.msra.mxu0 %v133
  %489 = vmatprep.subr.mxu0 0.0
  %490 = vmatpush1.msra.mxu0 0.0
  %491 = vmatprep.subr.mxu0 0.0
  %492 = vmatpush1.msra.mxu0 0.0
  %493 = vmatprep.subr.mxu0 0.0
  %494 = vmatpush1.msra.mxu0 0.0
  %495 = vmatprep.subr.mxu0 0.0
  %496 = vmatpush1.msra.mxu0 0.0
  %497 = vmatprep.subr.mxu0 0.0
  %498 = vmatpush1.msra.mxu0 0.0
  %499 = vmatprep.subr.mxu0 0.0
  %500 = vmatpush1.msra.mxu0 0.0
  %501 = vmatprep.subr.mxu0 0.0
  %502 = vmatpush1.msra.mxu0 0.0
  %503 = vmatprep.subr.mxu0 0.0
  %504 = vmatpush1.msra.mxu0 0.0
  %505 = vmatprep.subr.mxu0 0.0
  %506 = vmatpush1.msra.mxu0 0.0
  %507 = vmatprep.subr.mxu0 0.0
  %508 = vmatpush1.msra.mxu0 0.0
  %509 = vmatprep.subr.mxu0 0.0
  %510 = vmatpush1.msra.mxu0 0.0
  %511 = vmatprep.subr.mxu0 0.0
  %512 = vmatpush1.msra.mxu0 0.0
  %513 = vmatprep.subr.mxu0 0.0
  %514 = vmatpush1.msra.mxu0 0.0
  %515 = vmatprep.subr.mxu0 0.0
  %516 = vmatpush1.msra.mxu0 0.0
  %517 = vmatprep.subr.mxu0 0.0
  %518 = vmatpush1.msra.mxu0 0.0
  %519 = vmatprep.subr.mxu0 0.0
  %520 = vmatpush1.msra.mxu0 0.0
  %521 = vmatprep.subr.mxu0 0.0
  %522 = vmatpush1.msra.mxu0 0.0
  %523 = vmatprep.subr.mxu0 0.0
  %524 = vmatpush1.msra.mxu0 0.0
  %525 = vmatprep.subr.mxu0 0.0
  %526 = vmatpush1.msra.mxu0 0.0
  %527 = vmatprep.subr.mxu0 0.0
  %528 = vmatpush1.msra.mxu0 0.0
  %529 = vmatprep.subr.mxu0 0.0
  %530 = vmatpush1.msra.mxu0 0.0
  %531 = vmatprep.subr.mxu0 0.0
  %532 = vmatpush1.msra.mxu0 0.0
  %533 = vmatprep.subr.mxu0 0.0
  %534 = vmatpush1.msra.mxu0 0.0
  %535 = vmatprep.subr.mxu0 0.0
  %536 = vmatpush1.msra.mxu0 0.0
  %537 = vmatprep.subr.mxu0 0.0
  %538 = vmatpush1.msra.mxu0 0.0
  %539 = vmatprep.subr.mxu0 0.0
  %540 = vmatpush1.msra.mxu0 0.0
  %541 = vmatprep.subr.mxu0 0.0
  %542 = vmatpush1.msra.mxu0 0.0
  %543 = vmatprep.subr.mxu0 0.0
  %544 = vmatpush1.msra.mxu0 0.0
  %545 = vmatprep.mubr.f32.mxu0 0.0
  %546 = vmatmul.mubr.f32.gmra.mrb[0].mxu0 %v409
  %v547 = vpop.f32.mrb[0].mxu0
  %v548 = vadd.f32 0.0, %v547
  %v549 = vpop.f32.mrb[0].mxu0
  %550 = vdwg.mxu0
  %v552 = vrot.slane %v548, 4
  %v554 = vadd.f32 %v122, %v552
  %v555 = vtanh.pop %v554
  %v556 = vadd.f32 %v555, 1.0
  %v557 = vmul.f32 %v556, 0.5
  %v559 = vrot.slane %v398, 6
  %v561 = vmul.f32 %v557, %v559
  %563 = vrot.lane.b32.xlu0 %v555, 64
  %v564 = vpop.permute.xlu0 %563
  %v566 = vmul.f32 %v557, %v564
  %568 = vrot.lane.b32.xlu0 %v566, 32
  %v569 = vpop.permute.xlu0 %568
  %v571 = vadd.f32 %v561, %v569
  %v572 = vtanh.pop %v571
  %574 = vrot.lane.b32.xlu0 %v572, 64
  %v575 = vpop.permute.xlu0 %574
  %v577 = vmul.f32 %v557, %v575
  %v579 = vrot.slane %v577, 4
  %580 = vrot.lane.b32.xlu0 %v579, 32
  %v581 = vpop.permute.xlu0 %580
  %v582 = vsel %vm138, %v581, 0
  %584 = vmatprep.subr.mxu0 0.0
  %585 = vmatpush1.msra.mxu0 %v134
  %586 = vmatprep.subr.mxu0 0.0
  %587 = vmatpush1.msra.mxu0 %v135
  %588 = vmatprep.subr.mxu0 0.0
  %589 = vmatpush1.msra.mxu0 %v136
  %590 = vmatprep.subr.mxu0 0.0
  %591 = vmatpush1.msra.mxu0 %v137
  %592 = vmatprep.subr.mxu0 0.0
  %593 = vmatpush1.msra.mxu0 0.0
  %594 = vmatprep.subr.mxu0 0.0
  %595 = vmatpush1.msra.mxu0 0.0
  %596 = vmatprep.subr.mxu0 0.0
  %597 = vmatpush1.msra.mxu0 0.0
  %598 = vmatprep.subr.mxu0 0.0
  %599 = vmatpush1.msra.mxu0 0.0
  %600 = vmatprep.subr.mxu0 0.0
  %601 = vmatpush1.msra.mxu0 0.0
  %602 = vmatprep.subr.mxu0 0.0
  %603 = vmatpush1.msra.mxu0 0.0
  %604 = vmatprep.subr.mxu0 0.0
  %605 = vmatpush1.msra.mxu0 0.0
  %606 = vmatprep.subr.mxu0 0.0
  %607 = vmatpush1.msra.mxu0 0.0
  %608 = vmatprep.subr.mxu0 0.0
  %609 = vmatpush1.msra.mxu0 0.0
  %610 = vmatprep.subr.mxu0 0.0
  %611 = vmatpush1.msra.mxu0 0.0
  %612 = vmatprep.subr.mxu0 0.0
  %613 = vmatpush1.msra.mxu0 0.0
  %614 = vmatprep.subr.mxu0 0.0
  %615 = vmatpush1.msra.mxu0 0.0
  %616 = vmatprep.subr.mxu0 0.0
  %617 = vmatpush1.msra.mxu0 0.0
  %618 = vmatprep.subr.mxu0 0.0
  %619 = vmatpush1.msra.mxu0 0.0
  %620 = vmatprep.subr.mxu0 0.0
  %621 = vmatpush1.msra.mxu0 0.0
  %622 = vmatprep.subr.mxu0 0.0
  %623 = vmatpush1.msra.mxu0 0.0
  %624 = vmatprep.subr.mxu0 0.0
  %625 = vmatpush1.msra.mxu0 0.0
  %626 = vmatprep.subr.mxu0 0.0
  %627 = vmatpush1.msra.mxu0 0.0
  %628 = vmatprep.subr.mxu0 0.0
  %629 = vmatpush1.msra.mxu0 0.0
  %630 = vmatprep.subr.mxu0 0.0
  %631 = vmatpush1.msra.mxu0 0.0
  %632 = vmatprep.subr.mxu0 0.0
  %633 = vmatpush1.msra.mxu0 0.0
  %634 = vmatprep.subr.mxu0 0.0
  %635 = vmatpush1.msra.mxu0 0.0
  %636 = vmatprep.subr.mxu0 0.0
  %637 = vmatpush1.msra.mxu0 0.0
  %638 = vmatprep.subr.mxu0 0.0
  %639 = vmatpush1.msra.mxu0 0.0
  %640 = vmatprep.subr.mxu0 0.0
  %641 = vmatpush1.msra.mxu0 0.0
  %642 = vmatprep.subr.mxu0 0.0
  %643 = vmatpush1.msra.mxu0 0.0
  %644 = vmatprep.subr.mxu0 0.0
  %645 = vmatpush1.msra.mxu0 0.0
  %646 = vmatprep.subr.mxu0 0.0
  %647 = vmatpush1.msra.mxu0 0.0
  %648 = vmatprep.mubr.f32.mxu0 0.0
  %649 = vmatmul.mubr.f32.gmra.mrb[0].mxu0 %v582
  %v650 = vpop.f32.mrb[0].mxu0
  %v651 = vadd.f32 0.0, %v650
  %v652 = vpop.f32.mrb[0].mxu0
  %653 = vdwg.mxu0
  %654 = vmatprep.subr.mxu0 0.0
  %655 = vmatpush1.msra.mxu0 %v130
  %656 = vmatprep.subr.mxu0 0.0
  %657 = vmatpush1.msra.mxu0 %v131
  %658 = vmatprep.subr.mxu0 0.0
  %659 = vmatpush1.msra.mxu0 %v132
  %660 = vmatprep.subr.mxu0 0.0
  %661 = vmatpush1.msra.mxu0 %v133
  %662 = vmatprep.subr.mxu0 0.0
  %663 = vmatpush1.msra.mxu0 0.0
  %664 = vmatprep.subr.mxu0 0.0
  %665 = vmatpush1.msra.mxu0 0.0
  %666 = vmatprep.subr.mxu0 0.0
  %667 = vmatpush1.msra.mxu0 0.0
  %668 = vmatprep.subr.mxu0 0.0
  %669 = vmatpush1.msra.mxu0 0.0
  %670 = vmatprep.subr.mxu0 0.0
  %671 = vmatpush1.msra.mxu0 0.0
  %672 = vmatprep.subr.mxu0 0.0
  %673 = vmatpush1.msra.mxu0 0.0
  %674 = vmatprep.subr.mxu0 0.0
  %675 = vmatpush1.msra.mxu0 0.0
  %676 = vmatprep.subr.mxu0 0.0
  %677 = vmatpush1.msra.mxu0 0.0
  %678 = vmatprep.subr.mxu0 0.0
  %679 = vmatpush1.msra.mxu0 0.0
  %680 = vmatprep.subr.mxu0 0.0
  %681 = vmatpush1.msra.mxu0 0.0
  %682 = vmatprep.subr.mxu0 0.0
  %683 = vmatpush1.msra.mxu0 0.0
  %684 = vmatprep.subr.mxu0 0.0
  %685 = vmatpush1.msra.mxu0 0.0
  %686 = vmatprep.subr.mxu0 0.0
  %687 = vmatpush1.msra.mxu0 0.0
  %688 = vmatprep.subr.mxu0 0.0
  %689 = vmatpush1.msra.mxu0 0.0
  %690 = vmatprep.subr.mxu0 0.0
  %691 = vmatpush1.msra.mxu0 0.0
  %692 = vmatprep.subr.mxu0 0.0
  %693 = vmatpush1.msra.mxu0 0.0
  %694 = vmatprep.subr.mxu0 0.0
  %695 = vmatpush1.msra.mxu0 0.0
  %696 = vmatprep.subr.mxu0 0.0
  %697 = vmatpush1.msra.mxu0 0.0
  %698 = vmatprep.subr.mxu0 0.0
  %699 = vmatpush1.msra.mxu0 0.0
  %700 = vmatprep.subr.mxu0 0.0
  %701 = vmatpush1.msra.mxu0 0.0
  %702 = vmatprep.subr.mxu0 0.0
  %703 = vmatpush1.msra.mxu0 0.0
  %704 = vmatprep.subr.mxu0 0.0
  %705 = vmatpush1.msra.mxu0 0.0
  %706 = vmatprep.subr.mxu0 0.0
  %707 = vmatpush1.msra.mxu0 0.0
  %708 = vmatprep.subr.mxu0 0.0
  %709 = vmatpush1.msra.mxu0 0.0
  %710 = vmatprep.subr.mxu0 0.0
  %711 = vmatpush1.msra.mxu0 0.0
  %712 = vmatprep.subr.mxu0 0.0
  %713 = vmatpush1.msra.mxu0 0.0
  %714 = vmatprep.subr.mxu0 0.0
  %715 = vmatpush1.msra.mxu0 0.0
  %716 = vmatprep.subr.mxu0 0.0
  %717 = vmatpush1.msra.mxu0 0.0
  %718 = vmatprep.mubr.f32.mxu0 0.0
  %719 = vmatmul.mubr.f32.gmra.mrb[0].mxu0 %v582
  %v720 = vpop.f32.mrb[0].mxu0
  %v721 = vadd.f32 0.0, %v720
  %v722 = vpop.f32.mrb[0].mxu0
  %723 = vdwg.mxu0
  %v725 = vrot.slane %v721, 2
  %v727 = vadd.f32 %v122, %v725
  %v728 = vtanh.pop %v727
  %v729 = vadd.f32 %v728, 1.0
  %v730 = vmul.f32 %v729, 0.5
  %v732 = vrot.slane %v571, 6
  %v734 = vmul.f32 %v730, %v732
  %736 = vrot.lane.b32.xlu0 %v728, 64
  %v737 = vpop.permute.xlu0 %736
  %v739 = vmul.f32 %v730, %v737
  %741 = vrot.lane.b32.xlu0 %v739, 32
  %v742 = vpop.permute.xlu0 %741
  %v744 = vadd.f32 %v734, %v742
  %v745 = vtanh.pop %v744
  %747 = vrot.lane.b32.xlu0 %v745, 64
  %v748 = vpop.permute.xlu0 %747
  %v750 = vmul.f32 %v730, %v748
  %v752 = vrot.slane %v750, 6
  %753 = vrot.lane.b32.xlu0 %v752, 32
  %v754 = vpop.permute.xlu0 %753
  %v755 = vsel %vm138, %v754, 0
  %757 = vmatprep.subr.mxu0 0.0
  %758 = vmatpush1.msra.mxu0 %v134
  %759 = vmatprep.subr.mxu0 0.0
  %760 = vmatpush1.msra.mxu0 %v135
  %761 = vmatprep.subr.mxu0 0.0
  %762 = vmatpush1.msra.mxu0 %v136
  %763 = vmatprep.subr.mxu0 0.0
  %764 = vmatpush1.msra.mxu0 %v137
  %765 = vmatprep.subr.mxu0 0.0
  %766 = vmatpush1.msra.mxu0 0.0
  %767 = vmatprep.subr.mxu0 0.0
  %768 = vmatpush1.msra.mxu0 0.0
  %769 = vmatprep.subr.mxu0 0.0
  %770 = vmatpush1.msra.mxu0 0.0
  %771 = vmatprep.subr.mxu0 0.0
  %772 = vmatpush1.msra.mxu0 0.0
  %773 = vmatprep.subr.mxu0 0.0
  %774 = vmatpush1.msra.mxu0 0.0
  %775 = vmatprep.subr.mxu0 0.0
  %776 = vmatpush1.msra.mxu0 0.0
  %777 = vmatprep.subr.mxu0 0.0
  %778 = vmatpush1.msra.mxu0 0.0
  %779 = vmatprep.subr.mxu0 0.0
  %780 = vmatpush1.msra.mxu0 0.0
  %781 = vmatprep.subr.mxu0 0.0
  %782 = vmatpush1.msra.mxu0 0.0
  %783 = vmatprep.subr.mxu0 0.0
  %784 = vmatpush1.msra.mxu0 0.0
  %785 = vmatprep.subr.mxu0 0.0
  %786 = vmatpush1.msra.mxu0 0.0
  %787 = vmatprep.subr.mxu0 0.0
  %788 = vmatpush1.msra.mxu0 0.0
  %789 = vmatprep.subr.mxu0 0.0
  %790 = vmatpush1.msra.mxu0 0.0
  %791 = vmatprep.subr.mxu0 0.0
  %792 = vmatpush1.msra.mxu0 0.0
  %793 = vmatprep.subr.mxu0 0.0
  %794 = vmatpush1.msra.mxu0 0.0
  %795 = vmatprep.subr.mxu0 0.0
  %796 = vmatpush1.msra.mxu0 0.0
  %797 = vmatprep.subr.mxu0 0.0
  %798 = vmatpush1.msra.mxu0 0.0
  %799 = vmatprep.subr.mxu0 0.0
  %800 = vmatpush1.msra.mxu0 0.0
  %801 = vmatprep.subr.mxu0 0.0
  %802 = vmatpush1.msra.mxu0 0.0
  %803 = vmatprep.subr.mxu0 0.0
  %804 = vmatpush1.msra.mxu0 0.0
  %805 = vmatprep.subr.mxu0 0.0
  %806 = vmatpush1.msra.mxu0 0.0
  %807 = vmatprep.subr.mxu0 0.0
  %808 = vmatpush1.msra.mxu0 0.0
  %809 = vmatprep.subr.mxu0 0.0
  %810 = vmatpush1.msra.mxu0 0.0
  %811 = vmatprep.subr.mxu0 0.0
  %812 = vmatpush1.msra.mxu0 0.0
  %813 = vmatprep.subr.mxu0 0.0
  %814 = vmatpush1.msra.mxu0 0.0
  %815 = vmatprep.subr.mxu0 0.0
  %816 = vmatpush1.msra.mxu0 0.0
  %817 = vmatprep.subr.mxu0 0.0
  %818 = vmatpush1.msra.mxu0 0.0
  %819 = vmatprep.subr.mxu0 0.0
  %820 = vmatpush1.msra.mxu0 0.0
  %821 = vmatprep.mubr.f32.mxu0 0.0
  %822 = vmatmul.mubr.f32.gmra.mrb[0].mxu0 %v755
  %v823 = vpop.f32.mrb[0].mxu0
  %v824 = vadd.f32 0.0, %v823
  %v825 = vpop.f32.mrb[0].mxu0
  %826 = vdwg.mxu0
  %827 = vmatprep.subr.mxu0 0.0
  %828 = vmatpush1.msra.mxu0 %v130
  %829 = vmatprep.subr.mxu0 0.0
  %830 = vmatpush1.msra.mxu0 %v131
  %831 = vmatprep.subr.mxu0 0.0
  %832 = vmatpush1.msra.mxu0 %v132
  %833 = vmatprep.subr.mxu0 0.0
  %834 = vmatpush1.msra.mxu0 %v133
  %835 = vmatprep.subr.mxu0 0.0
  %836 = vmatpush1.msra.mxu0 0.0
  %837 = vmatprep.subr.mxu0 0.0
  %838 = vmatpush1.msra.mxu0 0.0
  %839 = vmatprep.subr.mxu0 0.0
  %840 = vmatpush1.msra.mxu0 0.0
  %841 = vmatprep.subr.mxu0 0.0
  %842 = vmatpush1.msra.mxu0 0.0
  %843 = vmatprep.subr.mxu0 0.0
  %844 = vmatpush1.msra.mxu0 0.0
  %845 = vmatprep.subr.mxu0 0.0
  %846 = vmatpush1.msra.mxu0 0.0
  %847 = vmatprep.subr.mxu0 0.0
  %848 = vmatpush1.msra.mxu0 0.0
  %849 = vmatprep.subr.mxu0 0.0
  %850 = vmatpush1.msra.mxu0 0.0
  %851 = vmatprep.subr.mxu0 0.0
  %852 = vmatpush1.msra.mxu0 0.0
  %853 = vmatprep.subr.mxu0 0.0
  %854 = vmatpush1.msra.mxu0 0.0
  %855 = vmatprep.subr.mxu0 0.0
  %856 = vmatpush1.msra.mxu0 0.0
  %857 = vmatprep.subr.mxu0 0.0
  %858 = vmatpush1.msra.mxu0 0.0
  %859 = vmatprep.subr.mxu0 0.0
  %860 = vmatpush1.msra.mxu0 0.0
  %861 = vmatprep.subr.mxu0 0.0
  %862 = vmatpush1.msra.mxu0 0.0
  %863 = vmatprep.subr.mxu0 0.0
  %864 = vmatpush1.msra.mxu0 0.0
  %865 = vmatprep.subr.mxu0 0.0
  %866 = vmatpush1.msra.mxu0 0.0
  %867 = vmatprep.subr.mxu0 0.0
  %868 = vmatpush1.msra.mxu0 0.0
  %869 = vmatprep.subr.mxu0 0.0
  %870 = vmatpush1.msra.mxu0 0.0
  %871 = vmatprep.subr.mxu0 0.0
  %872 = vmatpush1.msra.mxu0 0.0
  %873 = vmatprep.subr.mxu0 0.0
  %874 = vmatpush1.msra.mxu0 0.0
  %875 = vmatprep.subr.mxu0 0.0
  %876 = vmatpush1.msra.mxu0 0.0
  %877 = vmatprep.subr.mxu0 0.0
  %878 = vmatpush1.msra.mxu0 0.0
  %879 = vmatprep.subr.mxu0 0.0
  %880 = vmatpush1.msra.mxu0 0.0
  %881 = vmatprep.subr.mxu0 0.0
  %882 = vmatpush1.msra.mxu0 0.0
  %883 = vmatprep.subr.mxu0 0.0
  %884 = vmatpush1.msra.mxu0 0.0
  %885 = vmatprep.subr.mxu0 0.0
  %886 = vmatpush1.msra.mxu0 0.0
  %887 = vmatprep.subr.mxu0 0.0
  %888 = vmatpush1.msra.mxu0 0.0
  %889 = vmatprep.subr.mxu0 0.0
  %890 = vmatpush1.msra.mxu0 0.0
  %891 = vmatprep.mubr.f32.mxu0 0.0
  %892 = vmatmul.mubr.f32.gmra.mrb[0].mxu0 %v755
  %v893 = vpop.f32.mrb[0].mxu0
  %v894 = vadd.f32 0.0, %v893
  %v895 = vpop.f32.mrb[0].mxu0
  %896 = vdwg.mxu0
  %v897 = vadd.f32 %v127, %v894
  %v898 = vtanh.pop %v897
  %v899 = vadd.f32 %v898, 1.0
  %v900 = vmul.f32 %v899, 0.5
  %v902 = vrot.slane %v744, 6
  %v904 = vmul.f32 %v900, %v902
  %906 = vrot.lane.b32.xlu0 %v898, 64
  %v907 = vpop.permute.xlu0 %906
  %v909 = vmul.f32 %v900, %v907
  %911 = vrot.lane.b32.xlu0 %v909, 32
  %v912 = vpop.permute.xlu0 %911
  %v914 = vadd.f32 %v904, %v912
  %v915 = vtanh.pop %v914
  %917 = vrot.lane.b32.xlu0 %v915, 64
  %v918 = vpop.permute.xlu0 %917
  %v920 = vmul.f32 %v900, %v918
  %922 = vrot.lane.b32.xlu0 %v920, 32
  %v923 = vpop.permute.xlu0 %922
  %v924 = vsel %vm138, %v923, 0
  %926 = vmatprep.subr.mxu0 0.0
  %927 = vmatpush1.msra.mxu0 %v134
  %928 = vmatprep.subr.mxu0 0.0
  %929 = vmatpush1.msra.mxu0 %v135
  %930 = vmatprep.subr.mxu0 0.0
  %931 = vmatpush1.msra.mxu0 %v136
  %932 = vmatprep.subr.mxu0 0.0
  %933 = vmatpush1.msra.mxu0 %v137
  %934 = vmatprep.subr.mxu0 0.0
  %935 = vmatpush1.msra.mxu0 0.0
  %936 = vmatprep.subr.mxu0 0.0
  %937 = vmatpush1.msra.mxu0 0.0
  %938 = vmatprep.subr.mxu0 0.0
  %939 = vmatpush1.msra.mxu0 0.0
  %940 = vmatprep.subr.mxu0 0.0
  %941 = vmatpush1.msra.mxu0 0.0
  %942 = vmatprep.subr.mxu0 0.0
  %943 = vmatpush1.msra.mxu0 0.0
  %944 = vmatprep.subr.mxu0 0.0
  %945 = vmatpush1.msra.mxu0 0.0
  %946 = vmatprep.subr.mxu0 0.0
  %947 = vmatpush1.msra.mxu0 0.0
  %948 = vmatprep.subr.mxu0 0.0
  %949 = vmatpush1.msra.mxu0 0.0
  %950 = vmatprep.subr.mxu0 0.0
  %951 = vmatpush1.msra.mxu0 0.0
  %952 = vmatprep.subr.mxu0 0.0
  %953 = vmatpush1.msra.mxu0 0.0
  %954 = vmatprep.subr.mxu0 0.0
  %955 = vmatpush1.msra.mxu0 0.0
  %956 = vmatprep.subr.mxu0 0.0
  %957 = vmatpush1.msra.mxu0 0.0
  %958 = vmatprep.subr.mxu0 0.0
  %959 = vmatpush1.msra.mxu0 0.0
  %960 = vmatprep.subr.mxu0 0.0
  %961 = vmatpush1.msra.mxu0 0.0
  %962 = vmatprep.subr.mxu0 0.0
  %963 = vmatpush1.msra.mxu0 0.0
  %964 = vmatprep.subr.mxu0 0.0
  %965 = vmatpush1.msra.mxu0 0.0
  %966 = vmatprep.subr.mxu0 0.0
  %967 = vmatpush1.msra.mxu0 0.0
  %968 = vmatprep.subr.mxu0 0.0
  %969 = vmatpush1.msra.mxu0 0.0
  %970 = vmatprep.subr.mxu0 0.0
  %971 = vmatpush1.msra.mxu0 0.0
  %972 = vmatprep.subr.mxu0 0.0
  %973 = vmatpush1.msra.mxu0 0.0
  %974 = vmatprep.subr.mxu0 0.0
  %975 = vmatpush1.msra.mxu0 0.0
  %976 = vmatprep.subr.mxu0 0.0
  %977 = vmatpush1.msra.mxu0 0.0
  %978 = vmatprep.subr.mxu0 0.0
  %979 = vmatpush1.msra.mxu0 0.0
  %980 = vmatprep.subr.mxu0 0.0
  %981 = vmatpush1.msra.mxu0 0.0
  %982 = vmatprep.subr.mxu0 0.0
  %983 = vmatpush1.msra.mxu0 0.0
  %984 = vmatprep.subr.mxu0 0.0
  %985 = vmatpush1.msra.mxu0 0.0
  %986 = vmatprep.subr.mxu0 0.0
  %987 = vmatpush1.msra.mxu0 0.0
  %988 = vmatprep.subr.mxu0 0.0
  %989 = vmatpush1.msra.mxu0 0.0
  %990 = vmatprep.mubr.f32.mxu0 0.0
  %991 = vmatmul.mubr.f32.gmra.mrb[0].mxu0 %v924
  %v992 = vpop.f32.mrb[0].mxu0
  %v993 = vadd.f32 0.0, %v992
  %v994 = vpop.f32.mrb[0].mxu0
  %995 = vdwg.mxu0
  %996 = vmatprep.subr.mxu0 0.0
  %997 = vmatpush1.msra.mxu0 %v130
  %998 = vmatprep.subr.mxu0 0.0
  %999 = vmatpush1.msra.mxu0 %v131
  %1000 = vmatprep.subr.mxu0 0.0
  %1001 = vmatpush1.msra.mxu0 %v132
  %1002 = vmatprep.subr.mxu0 0.0
  %1003 = vmatpush1.msra.mxu0 %v133
  %1004 = vmatprep.subr.mxu0 0.0
  %1005 = vmatpush1.msra.mxu0 0.0
  %1006 = vmatprep.subr.mxu0 0.0
  %1007 = vmatpush1.msra.mxu0 0.0
  %1008 = vmatprep.subr.mxu0 0.0
  %1009 = vmatpush1.msra.mxu0 0.0
  %1010 = vmatprep.subr.mxu0 0.0
  %1011 = vmatpush1.msra.mxu0 0.0
  %1012 = vmatprep.subr.mxu0 0.0
  %1013 = vmatpush1.msra.mxu0 0.0
  %1014 = vmatprep.subr.mxu0 0.0
  %1015 = vmatpush1.msra.mxu0 0.0
  %1016 = vmatprep.subr.mxu0 0.0
  %1017 = vmatpush1.msra.mxu0 0.0
  %1018 = vmatprep.subr.mxu0 0.0
  %1019 = vmatpush1.msra.mxu0 0.0
  %1020 = vmatprep.subr.mxu0 0.0
  %1021 = vmatpush1.msra.mxu0 0.0
  %1022 = vmatprep.subr.mxu0 0.0
  %1023 = vmatpush1.msra.mxu0 0.0
  %1024 = vmatprep.subr.mxu0 0.0
  %1025 = vmatpush1.msra.mxu0 0.0
  %1026 = vmatprep.subr.mxu0 0.0
  %1027 = vmatpush1.msra.mxu0 0.0
  %1028 = vmatprep.subr.mxu0 0.0
  %1029 = vmatpush1.msra.mxu0 0.0
  %1030 = vmatprep.subr.mxu0 0.0
  %1031 = vmatpush1.msra.mxu0 0.0
  %1032 = vmatprep.subr.mxu0 0.0
  %1033 = vmatpush1.msra.mxu0 0.0
  %1034 = vmatprep.subr.mxu0 0.0
  %1035 = vmatpush1.msra.mxu0 0.0
  %1036 = vmatprep.subr.mxu0 0.0
  %1037 = vmatpush1.msra.mxu0 0.0
  %1038 = vmatprep.subr.mxu0 0.0
  %1039 = vmatpush1.msra.mxu0 0.0
  %1040 = vmatprep.subr.mxu0 0.0
  %1041 = vmatpush1.msra.mxu0 0.0
  %1042 = vmatprep.subr.mxu0 0.0
  %1043 = vmatpush1.msra.mxu0 0.0
  %1044 = vmatprep.subr.mxu0 0.0
  %1045 = vmatpush1.msra.mxu0 0.0
  %1046 = vmatprep.subr.mxu0 0.0
  %1047 = vmatpush1.msra.mxu0 0.0
  %1048 = vmatprep.subr.mxu0 0.0
  %1049 = vmatpush1.msra.mxu0 0.0
  %1050 = vmatprep.subr.mxu0 0.0
  %1051 = vmatpush1.msra.mxu0 0.0
  %1052 = vmatprep.subr.mxu0 0.0
  %1053 = vmatpush1.msra.mxu0 0.0
  %1054 = vmatprep.subr.mxu0 0.0
  %1055 = vmatpush1.msra.mxu0 0.0
  %1056 = vmatprep.subr.mxu0 0.0
  %1057 = vmatpush1.msra.mxu0 0.0
  %1058 = vmatprep.subr.mxu0 0.0
  %1059 = vmatpush1.msra.mxu0 0.0
  %1060 = vmatprep.mubr.f32.mxu0 0.0
  %1061 = vmatmul.mubr.f32.gmra.mrb[0].mxu0 %v924
  %v1062 = vpop.f32.mrb[0].mxu0
  %v1063 = vadd.f32 0.0, %v1062
  %v1064 = vpop.f32.mrb[0].mxu0
  %1065 = vdwg.mxu0
  %v1067 = vrot.slane %v1063, 6
  %v1069 = vadd.f32 %v127, %v1067
  %v1070 = vtanh.pop %v1069
  %v1071 = vadd.f32 %v1070, 1.0
  %v1072 = vmul.f32 %v1071, 0.5
  %v1074 = vrot.slane %v914, 6
  %v1076 = vmul.f32 %v1072, %v1074
  %1078 = vrot.lane.b32.xlu0 %v1070, 64
  %v1079 = vpop.permute.xlu0 %1078
  %v1081 = vmul.f32 %v1072, %v1079
  %1083 = vrot.lane.b32.xlu0 %v1081, 32
  %v1084 = vpop.permute.xlu0 %1083
  %v1086 = vadd.f32 %v1076, %v1084
  %v1087 = vtanh.pop %v1086
  %1089 = vrot.lane.b32.xlu0 %v1087, 64
  %v1090 = vpop.permute.xlu0 %1089
  %v1092 = vmul.f32 %v1072, %v1090
  %v1094 = vrot.slane %v1092, 2
  %1095 = vrot.lane.b32.xlu0 %v1094, 32
  %v1096 = vpop.permute.xlu0 %1095
  %v1097 = vsel %vm138, %v1096, 0
  %1099 = vmatprep.subr.mxu0 0.0
  %1100 = vmatpush1.msra.mxu0 %v134
  %1101 = vmatprep.subr.mxu0 0.0
  %1102 = vmatpush1.msra.mxu0 %v135
  %1103 = vmatprep.subr.mxu0 0.0
  %1104 = vmatpush1.msra.mxu0 %v136
  %1105 = vmatprep.subr.mxu0 0.0
  %1106 = vmatpush1.msra.mxu0 %v137
  %1107 = vmatprep.subr.mxu0 0.0
  %1108 = vmatpush1.msra.mxu0 0.0
  %1109 = vmatprep.subr.mxu0 0.0
  %1110 = vmatpush1.msra.mxu0 0.0
  %1111 = vmatprep.subr.mxu0 0.0
  %1112 = vmatpush1.msra.mxu0 0.0
  %1113 = vmatprep.subr.mxu0 0.0
  %1114 = vmatpush1.msra.mxu0 0.0
  %1115 = vmatprep.subr.mxu0 0.0
  %1116 = vmatpush1.msra.mxu0 0.0
  %1117 = vmatprep.subr.mxu0 0.0
  %1118 = vmatpush1.msra.mxu0 0.0
  %1119 = vmatprep.subr.mxu0 0.0
  %1120 = vmatpush1.msra.mxu0 0.0
  %1121 = vmatprep.subr.mxu0 0.0
  %1122 = vmatpush1.msra.mxu0 0.0
  %1123 = vmatprep.subr.mxu0 0.0
  %1124 = vmatpush1.msra.mxu0 0.0
  %1125 = vmatprep.subr.mxu0 0.0
  %1126 = vmatpush1.msra.mxu0 0.0
  %1127 = vmatprep.subr.mxu0 0.0
  %1128 = vmatpush1.msra.mxu0 0.0
  %1129 = vmatprep.subr.mxu0 0.0
  %1130 = vmatpush1.msra.mxu0 0.0
  %1131 = vmatprep.subr.mxu0 0.0
  %1132 = vmatpush1.msra.mxu0 0.0
  %1133 = vmatprep.subr.mxu0 0.0
  %1134 = vmatpush1.msra.mxu0 0.0
  %1135 = vmatprep.subr.mxu0 0.0
  %1136 = vmatpush1.msra.mxu0 0.0
  %1137 = vmatprep.subr.mxu0 0.0
  %1138 = vmatpush1.msra.mxu0 0.0
  %1139 = vmatprep.subr.mxu0 0.0
  %1140 = vmatpush1.msra.mxu0 0.0
  %1141 = vmatprep.subr.mxu0 0.0
  %1142 = vmatpush1.msra.mxu0 0.0
  %1143 = vmatprep.subr.mxu0 0.0
  %1144 = vmatpush1.msra.mxu0 0.0
  %1145 = vmatprep.subr.mxu0 0.0
  %1146 = vmatpush1.msra.mxu0 0.0
  %1147 = vmatprep.subr.mxu0 0.0
  %1148 = vmatpush1.msra.mxu0 0.0
  %1149 = vmatprep.subr.mxu0 0.0
  %1150 = vmatpush1.msra.mxu0 0.0
  %1151 = vmatprep.subr.mxu0 0.0
  %1152 = vmatpush1.msra.mxu0 0.0
  %1153 = vmatprep.subr.mxu0 0.0
  %1154 = vmatpush1.msra.mxu0 0.0
  %1155 = vmatprep.subr.mxu0 0.0
  %1156 = vmatpush1.msra.mxu0 0.0
  %1157 = vmatprep.subr.mxu0 0.0
  %1158 = vmatpush1.msra.mxu0 0.0
  %1159 = vmatprep.subr.mxu0 0.0
  %1160 = vmatpush1.msra.mxu0 0.0
  %1161 = vmatprep.subr.mxu0 0.0
  %1162 = vmatpush1.msra.mxu0 0.0
  %1163 = vmatprep.mubr.f32.mxu0 0.0
  %1164 = vmatmul.mubr.f32.gmra.mrb[0].mxu0 %v1097
  %v1165 = vpop.f32.mrb[0].mxu0
  %v1166 = vadd.f32 0.0, %v1165
  %v1167 = vpop.f32.mrb[0].mxu0
  %1168 = vdwg.mxu0
  %1169 = vmatprep.subr.mxu0 0.0
  %1170 = vmatpush1.msra.mxu0 %v130
  %1171 = vmatprep.subr.mxu0 0.0
  %1172 = vmatpush1.msra.mxu0 %v131
  %1173 = vmatprep.subr.mxu0 0.0
  %1174 = vmatpush1.msra.mxu0 %v132
  %1175 = vmatprep.subr.mxu0 0.0
  %1176 = vmatpush1.msra.mxu0 %v133
  %1177 = vmatprep.subr.mxu0 0.0
  %1178 = vmatpush1.msra.mxu0 0.0
  %1179 = vmatprep.subr.mxu0 0.0
  %1180 = vmatpush1.msra.mxu0 0.0
  %1181 = vmatprep.subr.mxu0 0.0
  %1182 = vmatpush1.msra.mxu0 0.0
  %1183 = vmatprep.subr.mxu0 0.0
  %1184 = vmatpush1.msra.mxu0 0.0
  %1185 = vmatprep.subr.mxu0 0.0
  %1186 = vmatpush1.msra.mxu0 0.0
  %1187 = vmatprep.subr.mxu0 0.0
  %1188 = vmatpush1.msra.mxu0 0.0
  %1189 = vmatprep.subr.mxu0 0.0
  %1190 = vmatpush1.msra.mxu0 0.0
  %1191 = vmatprep.subr.mxu0 0.0
  %1192 = vmatpush1.msra.mxu0 0.0
  %1193 = vmatprep.subr.mxu0 0.0
  %1194 = vmatpush1.msra.mxu0 0.0
  %1195 = vmatprep.subr.mxu0 0.0
  %1196 = vmatpush1.msra.mxu0 0.0
  %1197 = vmatprep.subr.mxu0 0.0
  %1198 = vmatpush1.msra.mxu0 0.0
  %1199 = vmatprep.subr.mxu0 0.0
  %1200 = vmatpush1.msra.mxu0 0.0
  %1201 = vmatprep.subr.mxu0 0.0
  %1202 = vmatpush1.msra.mxu0 0.0
  %1203 = vmatprep.subr.mxu0 0.0
  %1204 = vmatpush1.msra.mxu0 0.0
  %1205 = vmatprep.subr.mxu0 0.0
  %1206 = vmatpush1.msra.mxu0 0.0
  %1207 = vmatprep.subr.mxu0 0.0
  %1208 = vmatpush1.msra.mxu0 0.0
  %1209 = vmatprep.subr.mxu0 0.0
  %1210 = vmatpush1.msra.mxu0 0.0
  %1211 = vmatprep.subr.mxu0 0.0
  %1212 = vmatpush1.msra.mxu0 0.0
  %1213 = vmatprep.subr.mxu0 0.0
  %1214 = vmatpush1.msra.mxu0 0.0
  %1215 = vmatprep.subr.mxu0 0.0
  %1216 = vmatpush1.msra.mxu0 0.0
  %1217 = vmatprep.subr.mxu0 0.0
  %1218 = vmatpush1.msra.mxu0 0.0
  %1219 = vmatprep.subr.mxu0 0.0
  %1220 = vmatpush1.msra.mxu0 0.0
  %1221 = vmatprep.subr.mxu0 0.0
  %1222 = vmatpush1.msra.mxu0 0.0
  %1223 = vmatprep.subr.mxu0 0.0
  %1224 = vmatpush1.msra.mxu0 0.0
  %1225 = vmatprep.subr.mxu0 0.0
  %1226 = vmatpush1.msra.mxu0 0.0
  %1227 = vmatprep.subr.mxu0 0.0
  %1228 = vmatpush1.msra.mxu0 0.0
  %1229 = vmatprep.subr.mxu0 0.0
  %1230 = vmatpush1.msra.mxu0 0.0
  %1231 = vmatprep.subr.mxu0 0.0
  %1232 = vmatpush1.msra.mxu0 0.0
  %1233 = vmatprep.mubr.f32.mxu0 0.0
  %1234 = vmatmul.mubr.f32.gmra.mrb[0].mxu0 %v1097
  %v1235 = vpop.f32.mrb[0].mxu0
  %v1236 = vadd.f32 0.0, %v1235
  %v1237 = vpop.f32.mrb[0].mxu0
  %1238 = vdwg.mxu0
  %v1240 = vrot.slane %v1236, 4
  %v1242 = vadd.f32 %v127, %v1240
  %v1243 = vtanh.pop %v1242
  %v1244 = vadd.f32 %v1243, 1.0
  %v1245 = vmul.f32 %v1244, 0.5
  %v1247 = vrot.slane %v1086, 6
  %v1249 = vmul.f32 %v1245, %v1247
  %1251 = vrot.lane.b32.xlu0 %v1243, 64
  %v1252 = vpop.permute.xlu0 %1251
  %v1254 = vmul.f32 %v1245, %v1252
  %1256 = vrot.lane.b32.xlu0 %v1254, 32
  %v1257 = vpop.permute.xlu0 %1256
  %v1259 = vadd.f32 %v1249, %v1257
  %v1260 = vtanh.pop %v1259
  %1262 = vrot.lane.b32.xlu0 %v1260, 64
  %v1263 = vpop.permute.xlu0 %1262
  %v1265 = vmul.f32 %v1245, %v1263
  %v1267 = vrot.slane %v1265, 4
  %1268 = vrot.lane.b32.xlu0 %v1267, 32
  %v1269 = vpop.permute.xlu0 %1268
  %v1270 = vsel %vm138, %v1269, 0
  %1272 = vmatprep.subr.mxu0 0.0
  %1273 = vmatpush1.msra.mxu0 %v134
  %1274 = vmatprep.subr.mxu0 0.0
  %1275 = vmatpush1.msra.mxu0 %v135
  %1276 = vmatprep.subr.mxu0 0.0
  %1277 = vmatpush1.msra.mxu0 %v136
  %1278 = vmatprep.subr.mxu0 0.0
  %1279 = vmatpush1.msra.mxu0 %v137
  %1280 = vmatprep.subr.mxu0 0.0
  %1281 = vmatpush1.msra.mxu0 0.0
  %1282 = vmatprep.subr.mxu0 0.0
  %1283 = vmatpush1.msra.mxu0 0.0
  %1284 = vmatprep.subr.mxu0 0.0
  %1285 = vmatpush1.msra.mxu0 0.0
  %1286 = vmatprep.subr.mxu0 0.0
  %1287 = vmatpush1.msra.mxu0 0.0
  %1288 = vmatprep.subr.mxu0 0.0
  %1289 = vmatpush1.msra.mxu0 0.0
  %1290 = vmatprep.subr.mxu0 0.0
  %1291 = vmatpush1.msra.mxu0 0.0
  %1292 = vmatprep.subr.mxu0 0.0
  %1293 = vmatpush1.msra.mxu0 0.0
  %1294 = vmatprep.subr.mxu0 0.0
  %1295 = vmatpush1.msra.mxu0 0.0
  %1296 = vmatprep.subr.mxu0 0.0
  %1297 = vmatpush1.msra.mxu0 0.0
  %1298 = vmatprep.subr.mxu0 0.0
  %1299 = vmatpush1.msra.mxu0 0.0
  %1300 = vmatprep.subr.mxu0 0.0
  %1301 = vmatpush1.msra.mxu0 0.0
  %1302 = vmatprep.subr.mxu0 0.0
  %1303 = vmatpush1.msra.mxu0 0.0
  %1304 = vmatprep.subr.mxu0 0.0
  %1305 = vmatpush1.msra.mxu0 0.0
  %1306 = vmatprep.subr.mxu0 0.0
  %1307 = vmatpush1.msra.mxu0 0.0
  %1308 = vmatprep.subr.mxu0 0.0
  %1309 = vmatpush1.msra.mxu0 0.0
  %1310 = vmatprep.subr.mxu0 0.0
  %1311 = vmatpush1.msra.mxu0 0.0
  %1312 = vmatprep.subr.mxu0 0.0
  %1313 = vmatpush1.msra.mxu0 0.0
  %1314 = vmatprep.subr.mxu0 0.0
  %1315 = vmatpush1.msra.mxu0 0.0
  %1316 = vmatprep.subr.mxu0 0.0
  %1317 = vmatpush1.msra.mxu0 0.0
  %1318 = vmatprep.subr.mxu0 0.0
  %1319 = vmatpush1.msra.mxu0 0.0
  %1320 = vmatprep.subr.mxu0 0.0
  %1321 = vmatpush1.msra.mxu0 0.0
  %1322 = vmatprep.subr.mxu0 0.0
  %1323 = vmatpush1.msra.mxu0 0.0
  %1324 = vmatprep.subr.mxu0 0.0
  %1325 = vmatpush1.msra.mxu0 0.0
  %1326 = vmatprep.subr.mxu0 0.0
  %1327 = vmatpush1.msra.mxu0 0.0
  %1328 = vmatprep.subr.mxu0 0.0
  %1329 = vmatpush1.msra.mxu0 0.0
  %1330 = vmatprep.subr.mxu0 0.0
  %1331 = vmatpush1.msra.mxu0 0.0
  %1332 = vmatprep.subr.mxu0 0.0
  %1333 = vmatpush1.msra.mxu0 0.0
  %1334 = vmatprep.subr.mxu0 0.0
  %1335 = vmatpush1.msra.mxu0 0.0
  %1336 = vmatprep.mubr.f32.mxu0 0.0
  %1337 = vmatmul.mubr.f32.gmra.mrb[0].mxu0 %v1270
  %v1338 = vpop.f32.mrb[0].mxu0
  %v1339 = vadd.f32 0.0, %v1338
  %v1340 = vpop.f32.mrb[0].mxu0
  %1341 = vdwg.mxu0
  %1342 = vmatprep.subr.mxu0 0.0
  %1343 = vmatpush1.msra.mxu0 %v130
  %1344 = vmatprep.subr.mxu0 0.0
  %1345 = vmatpush1.msra.mxu0 %v131
  %1346 = vmatprep.subr.mxu0 0.0
  %1347 = vmatpush1.msra.mxu0 %v132
  %1348 = vmatprep.subr.mxu0 0.0
  %1349 = vmatpush1.msra.mxu0 %v133
  %1350 = vmatprep.subr.mxu0 0.0
  %1351 = vmatpush1.msra.mxu0 0.0
  %1352 = vmatprep.subr.mxu0 0.0
  %1353 = vmatpush1.msra.mxu0 0.0
  %1354 = vmatprep.subr.mxu0 0.0
  %1355 = vmatpush1.msra.mxu0 0.0
  %1356 = vmatprep.subr.mxu0 0.0
  %1357 = vmatpush1.msra.mxu0 0.0
  %1358 = vmatprep.subr.mxu0 0.0
  %1359 = vmatpush1.msra.mxu0 0.0
  %1360 = vmatprep.subr.mxu0 0.0
  %1361 = vmatpush1.msra.mxu0 0.0
  %1362 = vmatprep.subr.mxu0 0.0
  %1363 = vmatpush1.msra.mxu0 0.0
  %1364 = vmatprep.subr.mxu0 0.0
  %1365 = vmatpush1.msra.mxu0 0.0
  %1366 = vmatprep.subr.mxu0 0.0
  %1367 = vmatpush1.msra.mxu0 0.0
  %1368 = vmatprep.subr.mxu0 0.0
  %1369 = vmatpush1.msra.mxu0 0.0
  %1370 = vmatprep.subr.mxu0 0.0
  %1371 = vmatpush1.msra.mxu0 0.0
  %1372 = vmatprep.subr.mxu0 0.0
  %1373 = vmatpush1.msra.mxu0 0.0
  %1374 = vmatprep.subr.mxu0 0.0
  %1375 = vmatpush1.msra.mxu0 0.0
  %1376 = vmatprep.subr.mxu0 0.0
  %1377 = vmatpush1.msra.mxu0 0.0
  %1378 = vmatprep.subr.mxu0 0.0
  %1379 = vmatpush1.msra.mxu0 0.0
  %1380 = vmatprep.subr.mxu0 0.0
  %1381 = vmatpush1.msra.mxu0 0.0
  %1382 = vmatprep.subr.mxu0 0.0
  %1383 = vmatpush1.msra.mxu0 0.0
  %1384 = vmatprep.subr.mxu0 0.0
  %1385 = vmatpush1.msra.mxu0 0.0
  %1386 = vmatprep.subr.mxu0 0.0
  %1387 = vmatpush1.msra.mxu0 0.0
  %1388 = vmatprep.subr.mxu0 0.0
  %1389 = vmatpush1.msra.mxu0 0.0
  %1390 = vmatprep.subr.mxu0 0.0
  %1391 = vmatpush1.msra.mxu0 0.0
  %1392 = vmatprep.subr.mxu0 0.0
  %1393 = vmatpush1.msra.mxu0 0.0
  %1394 = vmatprep.subr.mxu0 0.0
  %1395 = vmatpush1.msra.mxu0 0.0
  %1396 = vmatprep.subr.mxu0 0.0
  %1397 = vmatpush1.msra.mxu0 0.0
  %1398 = vmatprep.subr.mxu0 0.0
  %1399 = vmatpush1.msra.mxu0 0.0
  %1400 = vmatprep.subr.mxu0 0.0
  %1401 = vmatpush1.msra.mxu0 0.0
  %1402 = vmatprep.subr.mxu0 0.0
  %1403 = vmatpush1.msra.mxu0 0.0
  %1404 = vmatprep.subr.mxu0 0.0
  %1405 = vmatpush1.msra.mxu0 0.0
  %1406 = vmatprep.mubr.f32.mxu0 0.0
  %1407 = vmatmul.mubr.f32.gmra.mrb[0].mxu0 %v1270
  %v1408 = vpop.f32.mrb[0].mxu0
  %v1409 = vadd.f32 0.0, %v1408
  %v1410 = vpop.f32.mrb[0].mxu0
  %1411 = vdwg.mxu0
  %v1413 = vrot.slane %v1409, 2
  %v1415 = vadd.f32 %v127, %v1413
  %v1416 = vtanh.pop %v1415
  %v1417 = vadd.f32 %v1416, 1.0
  %v1418 = vmul.f32 %v1417, 0.5
  %v1420 = vrot.slane %v1259, 6
  %v1422 = vmul.f32 %v1418, %v1420
  %1424 = vrot.lane.b32.xlu0 %v1416, 64
  %v1425 = vpop.permute.xlu0 %1424
  %v1427 = vmul.f32 %v1418, %v1425
  %1429 = vrot.lane.b32.xlu0 %v1427, 32
  %v1430 = vpop.permute.xlu0 %1429
  %v1432 = vadd.f32 %v1422, %v1430
  %v1433 = vtanh.pop %v1432
  %1435 = vrot.lane.b32.xlu0 %v1433, 64
  %v1436 = vpop.permute.xlu0 %1435
  %v1438 = vmul.f32 %v1418, %v1436
  %v1440 = vrot.slane %v1438, 6
  %1441 = vrot.lane.b32.xlu0 %v1440, 32
  %v1442 = vpop.permute.xlu0 %1441
  %v1443 = vsel %vm138, %v1442, 0
  %1445 = vmatprep.subr.mxu0 0.0
  %1446 = vmatpush1.msra.mxu0 %v134
  %1447 = vmatprep.subr.mxu0 0.0
  %1448 = vmatpush1.msra.mxu0 %v135
  %1449 = vmatprep.subr.mxu0 0.0
  %1450 = vmatpush1.msra.mxu0 %v136
  %1451 = vmatprep.subr.mxu0 0.0
  %1452 = vmatpush1.msra.mxu0 %v137
  %1453 = vmatprep.subr.mxu0 0.0
  %1454 = vmatpush1.msra.mxu0 0.0
  %1455 = vmatprep.subr.mxu0 0.0
  %1456 = vmatpush1.msra.mxu0 0.0
  %1457 = vmatprep.subr.mxu0 0.0
  %1458 = vmatpush1.msra.mxu0 0.0
  %1459 = vmatprep.subr.mxu0 0.0
  %1460 = vmatpush1.msra.mxu0 0.0
  %1461 = vmatprep.subr.mxu0 0.0
  %1462 = vmatpush1.msra.mxu0 0.0
  %1463 = vmatprep.subr.mxu0 0.0
  %1464 = vmatpush1.msra.mxu0 0.0
  %1465 = vmatprep.subr.mxu0 0.0
  %1466 = vmatpush1.msra.mxu0 0.0
  %1467 = vmatprep.subr.mxu0 0.0
  %1468 = vmatpush1.msra.mxu0 0.0
  %1469 = vmatprep.subr.mxu0 0.0
  %1470 = vmatpush1.msra.mxu0 0.0
  %1471 = vmatprep.subr.mxu0 0.0
  %1472 = vmatpush1.msra.mxu0 0.0
  %1473 = vmatprep.subr.mxu0 0.0
  %1474 = vmatpush1.msra.mxu0 0.0
  %1475 = vmatprep.subr.mxu0 0.0
  %1476 = vmatpush1.msra.mxu0 0.0
  %1477 = vmatprep.subr.mxu0 0.0
  %1478 = vmatpush1.msra.mxu0 0.0
  %1479 = vmatprep.subr.mxu0 0.0
  %1480 = vmatpush1.msra.mxu0 0.0
  %1481 = vmatprep.subr.mxu0 0.0
  %1482 = vmatpush1.msra.mxu0 0.0
  %1483 = vmatprep.subr.mxu0 0.0
  %1484 = vmatpush1.msra.mxu0 0.0
  %1485 = vmatprep.subr.mxu0 0.0
  %1486 = vmatpush1.msra.mxu0 0.0
  %1487 = vmatprep.subr.mxu0 0.0
  %1488 = vmatpush1.msra.mxu0 0.0
  %1489 = vmatprep.subr.mxu0 0.0
  %1490 = vmatpush1.msra.mxu0 0.0
  %1491 = vmatprep.subr.mxu0 0.0
  %1492 = vmatpush1.msra.mxu0 0.0
  %1493 = vmatprep.subr.mxu0 0.0
  %1494 = vmatpush1.msra.mxu0 0.0
  %1495 = vmatprep.subr.mxu0 0.0
  %1496 = vmatpush1.msra.mxu0 0.0
  %1497 = vmatprep.subr.mxu0 0.0
  %1498 = vmatpush1.msra.mxu0 0.0
  %1499 = vmatprep.subr.mxu0 0.0
  %1500 = vmatpush1.msra.mxu0 0.0
  %1501 = vmatprep.subr.mxu0 0.0
  %1502 = vmatpush1.msra.mxu0 0.0
  %1503 = vmatprep.subr.mxu0 0.0
  %1504 = vmatpush1.msra.mxu0 0.0
  %1505 = vmatprep.subr.mxu0 0.0
  %1506 = vmatpush1.msra.mxu0 0.0
  %1507 = vmatprep.subr.mxu0 0.0
  %1508 = vmatpush1.msra.mxu0 0.0
  %1509 = vmatprep.mubr.f32.mxu0 0.0
  %1510 = vmatmul.mubr.f32.gmra.mrb[0].mxu0 %v1443
  %v1511 = vpop.f32.mrb[0].mxu0
  %v1512 = vadd.f32 0.0, %v1511
  %v1513 = vpop.f32.mrb[0].mxu0
  %1514 = vdwg.mxu0
  %1516 = vrot.lane.b32.xlu0 %v478, 16
  %v1517 = vpop.permute.xlu0 %1516
  %1520 = vrot.lane.b32.xlu0 %v651, 32
  %v1521 = vpop.permute.xlu0 %1520
  %1524 = vrot.lane.b32.xlu0 %v824, 48
  %v1525 = vpop.permute.xlu0 %1524
  %1528 = vrot.lane.b32.xlu0 %v993, 64
  %v1529 = vpop.permute.xlu0 %1528
  %1532 = vrot.lane.b32.xlu0 %v1166, 80
  %v1533 = vpop.permute.xlu0 %1532
  %1536 = vrot.lane.b32.xlu0 %v1339, 96
  %v1537 = vpop.permute.xlu0 %1536
  %1540 = vrot.lane.b32.xlu0 %v1512, 112
  %v1541 = vpop.permute.xlu0 %1540
  %v1543 = vsel %vm48, %v305, %v1517
  %v1544 = vsel %vm138, %v1543, %v1521
  %vm1545 = vcmask 392192
  %v1546 = vsel %vm1545, %v1544, %v1525
  %vm1547 = vcmask 523264
  %v1548 = vsel %vm1547, %v1546, %v1529
  %vm1549 = vcmask 654336
  %v1550 = vsel %vm1549, %v1548, %v1533
  %vm1551 = vcmask 785408
  %v1552 = vsel %vm1551, %v1550, %v1537
  %vm1553 = vcmask 916480
  %v1554 = vsel %vm1553, %v1552, %v1541
  %v1555 = vld [vmem:[%s5] sm:$0x1]
  %v1557 = vlaneseq
  %v1558 = vshrl.u32 %v1557, 7
  %v1559 = vsub.s32 0, %v1558
  %v1560 = vrot.slane %v1555, %v1559
  %v1562 = vadd.f32 %v1554, %v1560
  %1563 = vst [vmem:[%s6] sm:$0x3] %v1562
  // Predicated region
  $region26: #{rnn_m2m_forward.1} parent=0 // pred_check
    _
  $region27: #{rnn_m2m_forward.1} parent=0 // pred_check_branch
    %1565 = sbr.rel (0) target = $region29
  $region28: #{rnn_m2m_forward.1} parent=0 // pred_region
    _
  $region29: #{rnn_m2m_forward.1} parent=0 // pred_fallthru
    _
  // Predicated region
  $region30: #{rnn_m2m_forward.1} parent=0 // pred_check
    _
  $region31: #{rnn_m2m_forward.1} parent=0 // pred_check_branch
    %1567 = sbr.rel (0) target = $region33
  $region32: #{rnn_m2m_forward.1} parent=0 // pred_region
    _
  $region33: #{rnn_m2m_forward.1} parent=0 // pred_fallthru
    _

</llo_original>
